<compile_context>
chip_gen: v7x
topology: tpu7x:2x2x1
jax: 0.10.0
libtpu: 0.0.40
codegen_flags: <defaults>
</compile_context>

<pallas_src>
import math

import jax
import jax.numpy as jnp
from jax.experimental import pallas as pl
from jax.experimental.pallas import tpu as pltpu


# ----------------------------------------------------------------------------
# Fused kernel: embedding gathers + GCN-mean + bidirectional 1-layer LSTM (B=1)
#
# Packed operand layout (built once on the host, see init_params):
#   wih_blk : (2E, 8H)  block-diag; column blocks [i_f,i_b,f_f,f_b,o_f,o_b,g_f,g_b]
#   whh_blk : (2H, 8H)  block-diag; same column order, rows = [h_fwd | h_bwd]
#   b_cat   : (1, 8H)   interleaved (bias_ih + bias_hh per direction)
# ----------------------------------------------------------------------------
def _fused_kernel(loc_ref, loc_train_ref,          # SMEM int32 index vectors
                  embl_ref, embg_ref,              # VMEM embedding tables
                  adj_ref, gcw_ref, gcb_ref,       # GCN operands
                  wih_ref, whh_ref, b_ref,         # packed bi-LSTM weights
                  gcn_ref, hist_ref, state_ref):   # outputs
    T = hist_ref.shape[0]
    H = gcw_ref.shape[1]
    N = adj_ref.shape[0]

    # ---- GCN branch: mean_nodes( relu(adj @ (emb_graph[loc_train] @ W) + b) ) ----
    g_rows = [embg_ref[pl.ds(loc_train_ref[i], 1), :] for i in range(N)]
    gfeat = jnp.concatenate(g_rows, axis=0)                         # (N, G)
    support = jnp.dot(gfeat, gcw_ref[...], preferred_element_type=jnp.float32)
    gc_out = jnp.dot(adj_ref[...], support,
                     preferred_element_type=jnp.float32) + gcb_ref[...]
    gcn_ref[...] = jnp.mean(jnp.maximum(gc_out, 0.0), axis=0, keepdims=True)

    # ---- Build packed [x_t | x_{T-1-t}] LSTM inputs from the embedding table ----
    x_rows = [embl_ref[pl.ds(loc_ref[t], 1), :] for t in range(T)]  # T x (1, E)
    x_fwd = jnp.concatenate(x_rows, axis=0)                         # (T, E)
    x_bwd = jnp.concatenate(x_rows[::-1], axis=0)                   # (T, E), reversed
    x_two = jnp.concatenate([x_fwd, x_bwd], axis=1)                 # (T, 2E)

    # One packed input projection for the whole sequence, both directions.
    xw = jnp.dot(x_two, wih_ref[...], preferred_element_type=jnp.float32) + b_ref[...]

    whh = whh_ref[...]                                  # (2H, 8H), hoisted once
    h_cat = jnp.zeros((1, 2 * H), jnp.float32)          # [h_fwd | h_bwd]
    c_cat = jnp.zeros((1, 2 * H), jnp.float32)

    fwd_hidden = []
    bwd_hidden = []
    # Fully-unrolled recurrence (T is a trace-time constant); one fused
    # block-diagonal matmul per step drives both directions.
    for t in range(T):
        g = xw[t:t + 1, :] + jnp.dot(h_cat, whh, preferred_element_type=jnp.float32)
        sig = jax.nn.sigmoid(g[:, 0:6 * H])             # [i_f,i_b,f_f,f_b,o_f,o_b]
        i_cat = sig[:, 0:2 * H]
        f_cat = sig[:, 2 * H:4 * H]
        o_cat = sig[:, 4 * H:6 * H]
        g_cat = jnp.tanh(g[:, 6 * H:8 * H])             # tanh only on the cell-gate block
        c_cat = f_cat * c_cat + i_cat * g_cat
        h_cat = o_cat * jnp.tanh(c_cat)
        fwd_hidden.append(h_cat[:, 0:H])                # forward hidden of time t
        bwd_hidden.append(h_cat[:, H:2 * H])            # backward hidden of time T-1-t

    # Single dense store of the whole history (no per-step masked 1xH stores).
    hist_ref[...] = jnp.concatenate(
        [jnp.concatenate(fwd_hidden, axis=0),
         jnp.concatenate(bwd_hidden[::-1], axis=0)], axis=1)        # (T, 2H)
    state_ref[...] = jnp.concatenate([h_cat, c_cat], axis=0)        # row0=h_n, row1=c_n


def fused_forward(loc, loc_train, emb_loc, emb_loc_graph, adj,
                  gc1_w, gc1_b, wih_blk, whh_blk, b_cat, t_enc):
    H = gc1_w.shape[1]
    vmem = pl.BlockSpec(memory_space=pltpu.MemorySpace.VMEM)
    smem = pl.BlockSpec(memory_space=pltpu.MemorySpace.SMEM)
    return pl.pallas_call(
        _fused_kernel,
        out_shape=(
            jax.ShapeDtypeStruct((1, H), jnp.float32),         # GCN mean
            jax.ShapeDtypeStruct((t_enc, 2 * H), jnp.float32), # hidden history [fwd|bwd]
            jax.ShapeDtypeStruct((2, 2 * H), jnp.float32),     # row0 = h_n, row1 = c_n
        ),
        in_specs=[smem, smem, vmem, vmem, vmem, vmem, vmem, vmem, vmem, vmem],
        out_specs=(vmem, vmem, vmem),
    )(loc, loc_train, emb_loc, emb_loc_graph, adj, gc1_w, gc1_b, wih_blk, whh_blk, b_cat)


# ----------------------------------------------------------------------------
# Parameters (deterministic in-script init, mimicking the module's __init__ /
# init_weights), with host-side packing of the fused LSTM weights.
# ----------------------------------------------------------------------------
_GATE_ORDER = (0, 1, 3, 2)   # PyTorch gate blocks [i,f,g,o] -> packed [i,f,o | g]


def _orthogonal(key, shape):
    a = jax.random.normal(key, shape, jnp.float32)
    q, _ = jnp.linalg.qr(a.T if shape[0] < shape[1] else a)
    q = q.T if shape[0] < shape[1] else q
    return q[: shape[0], : shape[1]].astype(jnp.float32)


def _pack_blockdiag_interleaved(top, bot, H):
    # top: (Dt, 4H) fwd weights, cols [i|f|g|o];  bot: (Db, 4H) bwd weights.
    # Returns (Dt+Db, 8H) with column blocks [i_f,i_b,f_f,f_b,o_f,o_b,g_f,g_b],
    # top rows feeding only fwd blocks, bottom rows only bwd blocks.
    Dt, Db = top.shape[0], bot.shape[0]
    z_t = jnp.zeros((Dt, H), jnp.float32)
    z_b = jnp.zeros((Db, H), jnp.float32)
    cols = []
    for k in _GATE_ORDER:
        cols.append(jnp.concatenate([top[:, k * H:(k + 1) * H], z_b], axis=0))
        cols.append(jnp.concatenate([z_t, bot[:, k * H:(k + 1) * H]], axis=0))
    return jnp.concatenate(cols, axis=1)


def _pack_bias_interleaved(bf, bb, H):
    parts = []
    for k in _GATE_ORDER:
        parts.append(bf[k * H:(k + 1) * H])
        parts.append(bb[k * H:(k + 1) * H])
    return jnp.concatenate(parts).reshape(1, 8 * H)


def init_params(key, loc_size, loc_emb_size, loc_graph_emb_size, hidden_size):
    H = hidden_size
    E = loc_emb_size
    G = loc_graph_emb_size
    keys = jax.random.split(key, 10)
    stdv = 1.0 / math.sqrt(H)

    def xavier(k, shape):
        bound = math.sqrt(6.0 / (shape[0] + shape[1]))
        return jax.random.uniform(k, shape, jnp.float32, -bound, bound)

    # Raw (PyTorch-layout) LSTM weights, transposed to (in, 4H), gate order [i|f|g|o].
    wih_f = xavier(keys[4], (4 * H, E)).T           # (E, 4H)
    whh_f = _orthogonal(keys[5], (4 * H, H)).T      # (H, 4H)
    wih_b = xavier(keys[6], (4 * H, E)).T
    whh_b = _orthogonal(keys[7], (4 * H, H)).T
    # init_weights() sets all LSTM biases to 0 (matches the PyTorch module).
    b_f = jnp.zeros((4 * H,), jnp.float32)
    b_b = jnp.zeros((4 * H,), jnp.float32)

    params = {
        "emb_loc": jax.random.normal(keys[0], (loc_size, E), jnp.float32),
        "emb_loc_graph": jax.random.normal(keys[1], (loc_size, G), jnp.float32),
        "gc1_w": jax.random.uniform(keys[2], (G, H), jnp.float32, -stdv, stdv),
        "gc1_b": jax.random.uniform(keys[3], (H,), jnp.float32, -stdv, stdv).reshape(1, H),
        # Packed fused-LSTM weights (built once; kernel sees only these).
        "wih_blk": _pack_blockdiag_interleaved(wih_f, wih_b, H),   # (2E, 8H)
        "whh_blk": _pack_blockdiag_interleaved(whh_f, whh_b, H),   # (2H, 8H)
        "b_cat": _pack_bias_interleaved(b_f, b_b, H),              # (1, 8H)
    }
    return params


# ----------------------------------------------------------------------------
# Full forward pass (only trivial reshapes remain outside the kernel).
# ----------------------------------------------------------------------------
def new_model_forward(params, loc, adj, loc_train, target_len):
    # loc: (seq_len,) int32, adj: (N, N) f32, loc_train: (N,) int32, target_len: python int
    # x[:-target_len + 1]
    # TODO(synk): PyTorch x[:-0] (target_len==1) yields an empty sequence; here it keeps the full sequence.
    T_enc = loc.shape[0] - target_len + 1

    gcn_mean, hist, state = fused_forward(
        loc, loc_train,
        params["emb_loc"], params["emb_loc_graph"], adj,
        params["gc1_w"], params["gc1_b"],
        params["wih_blk"], params["whh_blk"], params["b_cat"],
        T_enc,
    )

    H = params["gc1_w"].shape[1]
    hidden_history = hist[:, None, :]                 # (T, 1, 2H)
    c1_gcn = gcn_mean[None, :, :]                     # (1, 1, H)
    h1 = state[0].reshape(2, H)[:, None, :]           # (2, 1, H)  [fwd, bwd]
    c1 = state[1].reshape(2, H)[:, None, :]           # (2, 1, H)
    # NOTE: self.dropout is defined in __init__ but never applied in forward.
    return hidden_history, c1_gcn, (h1, c1)


if __name__ == "__main__":
    key = jax.random.PRNGKey(0)
    loc_size = 50
    loc_emb_size = 32
    loc_graph_emb_size = 16
    hidden_size = 32
    seq_len = 10
    n_nodes = 12
    target_len = 3

    k_par, k_loc, k_adj, k_train = jax.random.split(key, 4)
    params = init_params(k_par, loc_size, loc_emb_size, loc_graph_emb_size, hidden_size)

    loc = jax.random.randint(k_loc, (seq_len,), 0, loc_size, dtype=jnp.int32)
    loc_train = jax.random.randint(k_train, (n_nodes,), 0, loc_size, dtype=jnp.int32)
    adj = jax.random.uniform(k_adj, (n_nodes, n_nodes), jnp.float32)
    adj = adj / jnp.sum(adj, axis=1, keepdims=True)  # row-normalized adjacency

    hidden_history, c1_gcn, (h1, c1) = new_model_forward(params, loc, adj, loc_train, target_len)
    jax.block_until_ready(hidden_history)
    jax.block_until_ready(c1_gcn)
    jax.block_until_ready(h1)
    jax.block_until_ready(c1)

    assert hidden_history.shape == (seq_len - target_len + 1, 1, 2 * hidden_size)
    assert c1_gcn.shape == (1, 1, hidden_size)
    assert h1.shape == (2, 1, hidden_size) and c1.shape == (2, 1, hidden_size)
    print("KERNEL_OK")
</pallas_src>

<mosaic_0001>
module attributes {stable_mosaic.version = 11 : i64} {
  func.func @_fused_kernel(%arg0: memref<10xi32, #tpu.memory_space<smem>>, %arg1: memref<12xi32, #tpu.memory_space<smem>>, %arg2: memref<50x32xf32, #tpu.memory_space<vmem>>, %arg3: memref<50x16xf32, #tpu.memory_space<vmem>>, %arg4: memref<12x12xf32, #tpu.memory_space<vmem>>, %arg5: memref<16x32xf32, #tpu.memory_space<vmem>>, %arg6: memref<1x32xf32, #tpu.memory_space<vmem>>, %arg7: memref<64x256xf32, #tpu.memory_space<vmem>>, %arg8: memref<64x256xf32, #tpu.memory_space<vmem>>, %arg9: memref<1x256xf32, #tpu.memory_space<vmem>>, %arg10: memref<1x32xf32, #tpu.memory_space<vmem>>, %arg11: memref<8x64xf32, #tpu.memory_space<vmem>>, %arg12: memref<2x64xf32, #tpu.memory_space<vmem>>) attributes {dimension_semantics = [], scalar_prefetch = 0 : i64, scratch_operands = 0 : i64, tpu.core_type = #tpu.core_type<tc>} {
    %c0 = arith.constant 0 : index
    %0 = memref.load %arg1[%c0] : memref<12xi32, #tpu.memory_space<smem>>
    %1 = arith.index_cast %0 : i32 to index
    %c0_0 = arith.constant 0 : index
    %2 = vector.load %arg3[%1, %c0_0] : memref<50x16xf32, #tpu.memory_space<vmem>>, vector<1x16xf32>
    %c1 = arith.constant 1 : index
    %3 = memref.load %arg1[%c1] : memref<12xi32, #tpu.memory_space<smem>>
    %4 = arith.index_cast %3 : i32 to index
    %c0_1 = arith.constant 0 : index
    %5 = vector.load %arg3[%4, %c0_1] : memref<50x16xf32, #tpu.memory_space<vmem>>, vector<1x16xf32>
    %c2 = arith.constant 2 : index
    %6 = memref.load %arg1[%c2] : memref<12xi32, #tpu.memory_space<smem>>
    %7 = arith.index_cast %6 : i32 to index
    %c0_2 = arith.constant 0 : index
    %8 = vector.load %arg3[%7, %c0_2] : memref<50x16xf32, #tpu.memory_space<vmem>>, vector<1x16xf32>
    %c3 = arith.constant 3 : index
    %9 = memref.load %arg1[%c3] : memref<12xi32, #tpu.memory_space<smem>>
    %10 = arith.index_cast %9 : i32 to index
    %c0_3 = arith.constant 0 : index
    %11 = vector.load %arg3[%10, %c0_3] : memref<50x16xf32, #tpu.memory_space<vmem>>, vector<1x16xf32>
    %c4 = arith.constant 4 : index
    %12 = memref.load %arg1[%c4] : memref<12xi32, #tpu.memory_space<smem>>
    %13 = arith.index_cast %12 : i32 to index
    %c0_4 = arith.constant 0 : index
    %14 = vector.load %arg3[%13, %c0_4] : memref<50x16xf32, #tpu.memory_space<vmem>>, vector<1x16xf32>
    %c5 = arith.constant 5 : index
    %15 = memref.load %arg1[%c5] : memref<12xi32, #tpu.memory_space<smem>>
    %16 = arith.index_cast %15 : i32 to index
    %c0_5 = arith.constant 0 : index
    %17 = vector.load %arg3[%16, %c0_5] : memref<50x16xf32, #tpu.memory_space<vmem>>, vector<1x16xf32>
    %c6 = arith.constant 6 : index
    %18 = memref.load %arg1[%c6] : memref<12xi32, #tpu.memory_space<smem>>
    %19 = arith.index_cast %18 : i32 to index
    %c0_6 = arith.constant 0 : index
    %20 = vector.load %arg3[%19, %c0_6] : memref<50x16xf32, #tpu.memory_space<vmem>>, vector<1x16xf32>
    %c7 = arith.constant 7 : index
    %21 = memref.load %arg1[%c7] : memref<12xi32, #tpu.memory_space<smem>>
    %22 = arith.index_cast %21 : i32 to index
    %c0_7 = arith.constant 0 : index
    %23 = vector.load %arg3[%22, %c0_7] : memref<50x16xf32, #tpu.memory_space<vmem>>, vector<1x16xf32>
    %c8 = arith.constant 8 : index
    %24 = memref.load %arg1[%c8] : memref<12xi32, #tpu.memory_space<smem>>
    %25 = arith.index_cast %24 : i32 to index
    %c0_8 = arith.constant 0 : index
    %26 = vector.load %arg3[%25, %c0_8] : memref<50x16xf32, #tpu.memory_space<vmem>>, vector<1x16xf32>
    %c9 = arith.constant 9 : index
    %27 = memref.load %arg1[%c9] : memref<12xi32, #tpu.memory_space<smem>>
    %28 = arith.index_cast %27 : i32 to index
    %c0_9 = arith.constant 0 : index
    %29 = vector.load %arg3[%28, %c0_9] : memref<50x16xf32, #tpu.memory_space<vmem>>, vector<1x16xf32>
    %c10 = arith.constant 10 : index
    %30 = memref.load %arg1[%c10] : memref<12xi32, #tpu.memory_space<smem>>
    %31 = arith.index_cast %30 : i32 to index
    %c0_10 = arith.constant 0 : index
    %32 = vector.load %arg3[%31, %c0_10] : memref<50x16xf32, #tpu.memory_space<vmem>>, vector<1x16xf32>
    %c11 = arith.constant 11 : index
    %33 = memref.load %arg1[%c11] : memref<12xi32, #tpu.memory_space<smem>>
    %34 = arith.index_cast %33 : i32 to index
    %c0_11 = arith.constant 0 : index
    %35 = vector.load %arg3[%34, %c0_11] : memref<50x16xf32, #tpu.memory_space<vmem>>, vector<1x16xf32>
    %36 = tpu.concatenate %2, %5, %8, %11, %14, %17, %20, %23, %26, %29, %32, %35 in 0 : vector<1x16xf32>, vector<1x16xf32>, vector<1x16xf32>, vector<1x16xf32>, vector<1x16xf32>, vector<1x16xf32>, vector<1x16xf32>, vector<1x16xf32>, vector<1x16xf32>, vector<1x16xf32>, vector<1x16xf32>, vector<1x16xf32> -> vector<12x16xf32>
    %c0_12 = arith.constant 0 : index
    %c0_13 = arith.constant 0 : index
    %37 = vector.load %arg5[%c0_12, %c0_13] : memref<16x32xf32, #tpu.memory_space<vmem>>, vector<16x32xf32>
    %cst = arith.constant dense<0.000000e+00> : vector<12x32xf32>
    %38 = tpu.matmul %36, %37, %cst {dimension_numbers = #tpu.dot_dimension_numbers<[1], [0], [0], [1], [0, 0, 1, 1], [], []>} : vector<12x16xf32>, vector<16x32xf32>, vector<12x32xf32> -> vector<12x32xf32>
    %c0_14 = arith.constant 0 : index
    %c0_15 = arith.constant 0 : index
    %39 = vector.load %arg4[%c0_14, %c0_15] : memref<12x12xf32, #tpu.memory_space<vmem>>, vector<12x12xf32>
    %cst_16 = arith.constant dense<0.000000e+00> : vector<12x32xf32>
    %40 = tpu.matmul %39, %38, %cst_16 {dimension_numbers = #tpu.dot_dimension_numbers<[1], [0], [0], [1], [0, 0, 1, 1], [], []>} : vector<12x12xf32>, vector<12x32xf32>, vector<12x32xf32> -> vector<12x32xf32>
    %c0_17 = arith.constant 0 : index
    %c0_18 = arith.constant 0 : index
    %41 = vector.load %arg6[%c0_17, %c0_18] : memref<1x32xf32, #tpu.memory_space<vmem>>, vector<1x32xf32>
    %42 = vector.broadcast %41 : vector<1x32xf32> to vector<12x32xf32>
    %43 = arith.addf %40, %42 : vector<12x32xf32>
    %cst_19 = arith.constant 0.000000e+00 : f32
    %44 = vector.broadcast %cst_19 : f32 to vector<12x32xf32>
    %45 = arith.maximumf %43, %44 : vector<12x32xf32>
    %cst_20 = arith.constant dense<0.000000e+00> : vector<32xf32>
    %46 = vector.multi_reduction <add>, %45, %cst_20 [0] : vector<12x32xf32> to vector<32xf32>
    %47 = vector.shape_cast %46 : vector<32xf32> to vector<1x32xf32>
    %cst_21 = arith.constant 1.200000e+01 : f32
    %48 = vector.broadcast %cst_21 : f32 to vector<1x32xf32>
    %49 = arith.divf %47, %48 : vector<1x32xf32>
    %c0_22 = arith.constant 0 : index
    %c0_23 = arith.constant 0 : index
    %50 = vector.load %arg10[%c0_22, %c0_23] : memref<1x32xf32, #tpu.memory_space<vmem>>, vector<1x32xf32>
    tpu.vector_store %arg10[%c0_22, %c0_23], %49 {strides = array<i32>} : memref<1x32xf32, #tpu.memory_space<vmem>>, vector<1x32xf32>,
    %c0_24 = arith.constant 0 : index
    %51 = memref.load %arg0[%c0_24] : memref<10xi32, #tpu.memory_space<smem>>
    %52 = arith.index_cast %51 : i32 to index
    %c0_25 = arith.constant 0 : index
    %53 = vector.load %arg2[%52, %c0_25] : memref<50x32xf32, #tpu.memory_space<vmem>>, vector<1x32xf32>
    %c1_26 = arith.constant 1 : index
    %54 = memref.load %arg0[%c1_26] : memref<10xi32, #tpu.memory_space<smem>>
    %55 = arith.index_cast %54 : i32 to index
    %c0_27 = arith.constant 0 : index
    %56 = vector.load %arg2[%55, %c0_27] : memref<50x32xf32, #tpu.memory_space<vmem>>, vector<1x32xf32>
    %c2_28 = arith.constant 2 : index
    %57 = memref.load %arg0[%c2_28] : memref<10xi32, #tpu.memory_space<smem>>
    %58 = arith.index_cast %57 : i32 to index
    %c0_29 = arith.constant 0 : index
    %59 = vector.load %arg2[%58, %c0_29] : memref<50x32xf32, #tpu.memory_space<vmem>>, vector<1x32xf32>
    %c3_30 = arith.constant 3 : index
    %60 = memref.load %arg0[%c3_30] : memref<10xi32, #tpu.memory_space<smem>>
    %61 = arith.index_cast %60 : i32 to index
    %c0_31 = arith.constant 0 : index
    %62 = vector.load %arg2[%61, %c0_31] : memref<50x32xf32, #tpu.memory_space<vmem>>, vector<1x32xf32>
    %c4_32 = arith.constant 4 : index
    %63 = memref.load %arg0[%c4_32] : memref<10xi32, #tpu.memory_space<smem>>
    %64 = arith.index_cast %63 : i32 to index
    %c0_33 = arith.constant 0 : index
    %65 = vector.load %arg2[%64, %c0_33] : memref<50x32xf32, #tpu.memory_space<vmem>>, vector<1x32xf32>
    %c5_34 = arith.constant 5 : index
    %66 = memref.load %arg0[%c5_34] : memref<10xi32, #tpu.memory_space<smem>>
    %67 = arith.index_cast %66 : i32 to index
    %c0_35 = arith.constant 0 : index
    %68 = vector.load %arg2[%67, %c0_35] : memref<50x32xf32, #tpu.memory_space<vmem>>, vector<1x32xf32>
    %c6_36 = arith.constant 6 : index
    %69 = memref.load %arg0[%c6_36] : memref<10xi32, #tpu.memory_space<smem>>
    %70 = arith.index_cast %69 : i32 to index
    %c0_37 = arith.constant 0 : index
    %71 = vector.load %arg2[%70, %c0_37] : memref<50x32xf32, #tpu.memory_space<vmem>>, vector<1x32xf32>
    %c7_38 = arith.constant 7 : index
    %72 = memref.load %arg0[%c7_38] : memref<10xi32, #tpu.memory_space<smem>>
    %73 = arith.index_cast %72 : i32 to index
    %c0_39 = arith.constant 0 : index
    %74 = vector.load %arg2[%73, %c0_39] : memref<50x32xf32, #tpu.memory_space<vmem>>, vector<1x32xf32>
    %75 = tpu.concatenate %53, %56, %59, %62, %65, %68, %71, %74 in 0 : vector<1x32xf32>, vector<1x32xf32>, vector<1x32xf32>, vector<1x32xf32>, vector<1x32xf32>, vector<1x32xf32>, vector<1x32xf32>, vector<1x32xf32> -> vector<8x32xf32>
    %76 = tpu.concatenate %74, %71, %68, %65, %62, %59, %56, %53 in 0 : vector<1x32xf32>, vector<1x32xf32>, vector<1x32xf32>, vector<1x32xf32>, vector<1x32xf32>, vector<1x32xf32>, vector<1x32xf32>, vector<1x32xf32> -> vector<8x32xf32>
    %77 = tpu.concatenate %75, %76 in 1 : vector<8x32xf32>, vector<8x32xf32> -> vector<8x64xf32>
    %c0_40 = arith.constant 0 : index
    %c0_41 = arith.constant 0 : index
    %78 = vector.load %arg7[%c0_40, %c0_41] : memref<64x256xf32, #tpu.memory_space<vmem>>, vector<64x256xf32>
    %cst_42 = arith.constant dense<0.000000e+00> : vector<8x256xf32>
    %79 = tpu.matmul %77, %78, %cst_42 {dimension_numbers = #tpu.dot_dimension_numbers<[1], [0], [0], [1], [0, 0, 1, 1], [], []>} : vector<8x64xf32>, vector<64x256xf32>, vector<8x256xf32> -> vector<8x256xf32>
    %c0_43 = arith.constant 0 : index
    %c0_44 = arith.constant 0 : index
    %80 = vector.load %arg9[%c0_43, %c0_44] : memref<1x256xf32, #tpu.memory_space<vmem>>, vector<1x256xf32>
    %81 = vector.broadcast %80 : vector<1x256xf32> to vector<8x256xf32>
    %82 = arith.addf %79, %81 : vector<8x256xf32>
    %c0_45 = arith.constant 0 : index
    %c0_46 = arith.constant 0 : index
    %83 = vector.load %arg8[%c0_45, %c0_46] : memref<64x256xf32, #tpu.memory_space<vmem>>, vector<64x256xf32>
    %cst_47 = arith.constant 0.000000e+00 : f32
    %84 = vector.broadcast %cst_47 : f32 to vector<1x64xf32>
    %cst_48 = arith.constant 0.000000e+00 : f32
    %85 = vector.broadcast %cst_48 : f32 to vector<1x64xf32>
    %86 = vector.extract_strided_slice %82 {offsets = [0, 0], sizes = [1, 256], strides = [1, 1]} : vector<8x256xf32> to vector<1x256xf32>
    %cst_49 = arith.constant dense<0.000000e+00> : vector<1x256xf32>
    %87 = tpu.matmul %84, %83, %cst_49 {dimension_numbers = #tpu.dot_dimension_numbers<[1], [0], [0], [1], [0, 0, 1, 1], [], []>} : vector<1x64xf32>, vector<64x256xf32>, vector<1x256xf32> -> vector<1x256xf32>
    %88 = arith.addf %86, %87 : vector<1x256xf32>
    %89 = vector.extract_strided_slice %88 {offsets = [0, 0], sizes = [1, 192], strides = [1, 1]} : vector<1x256xf32> to vector<1x192xf32>
    %90 = arith.negf %89 : vector<1x192xf32>
    %91 = math.exp %90 : vector<1x192xf32>
    %cst_50 = arith.constant 1.000000e+00 : f32
    %92 = vector.broadcast %cst_50 : f32 to vector<1x192xf32>
    %93 = arith.addf %92, %91 : vector<1x192xf32>
    %94 = arith.divf %92, %93 : vector<1x192xf32>
    %95 = vector.extract_strided_slice %94 {offsets = [0, 0], sizes = [1, 64], strides = [1, 1]} : vector<1x192xf32> to vector<1x64xf32>
    %96 = vector.extract_strided_slice %94 {offsets = [0, 64], sizes = [1, 64], strides = [1, 1]} : vector<1x192xf32> to vector<1x64xf32>
    %97 = vector.extract_strided_slice %94 {offsets = [0, 128], sizes = [1, 64], strides = [1, 1]} : vector<1x192xf32> to vector<1x64xf32>
    %98 = vector.extract_strided_slice %88 {offsets = [0, 192], sizes = [1, 64], strides = [1, 1]} : vector<1x256xf32> to vector<1x64xf32>
    %99 = math.tanh %98 : vector<1x64xf32>
    %100 = arith.mulf %96, %85 : vector<1x64xf32>
    %101 = arith.mulf %95, %99 : vector<1x64xf32>
    %102 = arith.addf %100, %101 : vector<1x64xf32>
    %103 = math.tanh %102 : vector<1x64xf32>
    %104 = arith.mulf %97, %103 : vector<1x64xf32>
    %105 = vector.extract_strided_slice %104 {offsets = [0, 0], sizes = [1, 32], strides = [1, 1]} : vector<1x64xf32> to vector<1x32xf32>
    %106 = vector.extract_strided_slice %104 {offsets = [0, 32], sizes = [1, 32], strides = [1, 1]} : vector<1x64xf32> to vector<1x32xf32>
    %107 = vector.extract_strided_slice %82 {offsets = [1, 0], sizes = [1, 256], strides = [1, 1]} : vector<8x256xf32> to vector<1x256xf32>
    %cst_51 = arith.constant dense<0.000000e+00> : vector<1x256xf32>
    %108 = tpu.matmul %104, %83, %cst_51 {dimension_numbers = #tpu.dot_dimension_numbers<[1], [0], [0], [1], [0, 0, 1, 1], [], []>} : vector<1x64xf32>, vector<64x256xf32>, vector<1x256xf32> -> vector<1x256xf32>
    %109 = arith.addf %107, %108 : vector<1x256xf32>
    %110 = vector.extract_strided_slice %109 {offsets = [0, 0], sizes = [1, 192], strides = [1, 1]} : vector<1x256xf32> to vector<1x192xf32>
    %111 = arith.negf %110 : vector<1x192xf32>
    %112 = math.exp %111 : vector<1x192xf32>
    %cst_52 = arith.constant 1.000000e+00 : f32
    %113 = vector.broadcast %cst_52 : f32 to vector<1x192xf32>
    %114 = arith.addf %113, %112 : vector<1x192xf32>
    %115 = arith.divf %113, %114 : vector<1x192xf32>
    %116 = vector.extract_strided_slice %115 {offsets = [0, 0], sizes = [1, 64], strides = [1, 1]} : vector<1x192xf32> to vector<1x64xf32>
    %117 = vector.extract_strided_slice %115 {offsets = [0, 64], sizes = [1, 64], strides = [1, 1]} : vector<1x192xf32> to vector<1x64xf32>
    %118 = vector.extract_strided_slice %115 {offsets = [0, 128], sizes = [1, 64], strides = [1, 1]} : vector<1x192xf32> to vector<1x64xf32>
    %119 = vector.extract_strided_slice %109 {offsets = [0, 192], sizes = [1, 64], strides = [1, 1]} : vector<1x256xf32> to vector<1x64xf32>
    %120 = math.tanh %119 : vector<1x64xf32>
    %121 = arith.mulf %117, %102 : vector<1x64xf32>
    %122 = arith.mulf %116, %120 : vector<1x64xf32>
    %123 = arith.addf %121, %122 : vector<1x64xf32>
    %124 = math.tanh %123 : vector<1x64xf32>
    %125 = arith.mulf %118, %124 : vector<1x64xf32>
    %126 = vector.extract_strided_slice %125 {offsets = [0, 0], sizes = [1, 32], strides = [1, 1]} : vector<1x64xf32> to vector<1x32xf32>
    %127 = vector.extract_strided_slice %125 {offsets = [0, 32], sizes = [1, 32], strides = [1, 1]} : vector<1x64xf32> to vector<1x32xf32>
    %128 = vector.extract_strided_slice %82 {offsets = [2, 0], sizes = [1, 256], strides = [1, 1]} : vector<8x256xf32> to vector<1x256xf32>
    %cst_53 = arith.constant dense<0.000000e+00> : vector<1x256xf32>
    %129 = tpu.matmul %125, %83, %cst_53 {dimension_numbers = #tpu.dot_dimension_numbers<[1], [0], [0], [1], [0, 0, 1, 1], [], []>} : vector<1x64xf32>, vector<64x256xf32>, vector<1x256xf32> -> vector<1x256xf32>
    %130 = arith.addf %128, %129 : vector<1x256xf32>
    %131 = vector.extract_strided_slice %130 {offsets = [0, 0], sizes = [1, 192], strides = [1, 1]} : vector<1x256xf32> to vector<1x192xf32>
    %132 = arith.negf %131 : vector<1x192xf32>
    %133 = math.exp %132 : vector<1x192xf32>
    %cst_54 = arith.constant 1.000000e+00 : f32
    %134 = vector.broadcast %cst_54 : f32 to vector<1x192xf32>
    %135 = arith.addf %134, %133 : vector<1x192xf32>
    %136 = arith.divf %134, %135 : vector<1x192xf32>
    %137 = vector.extract_strided_slice %136 {offsets = [0, 0], sizes = [1, 64], strides = [1, 1]} : vector<1x192xf32> to vector<1x64xf32>
    %138 = vector.extract_strided_slice %136 {offsets = [0, 64], sizes = [1, 64], strides = [1, 1]} : vector<1x192xf32> to vector<1x64xf32>
    %139 = vector.extract_strided_slice %136 {offsets = [0, 128], sizes = [1, 64], strides = [1, 1]} : vector<1x192xf32> to vector<1x64xf32>
    %140 = vector.extract_strided_slice %130 {offsets = [0, 192], sizes = [1, 64], strides = [1, 1]} : vector<1x256xf32> to vector<1x64xf32>
    %141 = math.tanh %140 : vector<1x64xf32>
    %142 = arith.mulf %138, %123 : vector<1x64xf32>
    %143 = arith.mulf %137, %141 : vector<1x64xf32>
    %144 = arith.addf %142, %143 : vector<1x64xf32>
    %145 = math.tanh %144 : vector<1x64xf32>
    %146 = arith.mulf %139, %145 : vector<1x64xf32>
    %147 = vector.extract_strided_slice %146 {offsets = [0, 0], sizes = [1, 32], strides = [1, 1]} : vector<1x64xf32> to vector<1x32xf32>
    %148 = vector.extract_strided_slice %146 {offsets = [0, 32], sizes = [1, 32], strides = [1, 1]} : vector<1x64xf32> to vector<1x32xf32>
    %149 = vector.extract_strided_slice %82 {offsets = [3, 0], sizes = [1, 256], strides = [1, 1]} : vector<8x256xf32> to vector<1x256xf32>
    %cst_55 = arith.constant dense<0.000000e+00> : vector<1x256xf32>
    %150 = tpu.matmul %146, %83, %cst_55 {dimension_numbers = #tpu.dot_dimension_numbers<[1], [0], [0], [1], [0, 0, 1, 1], [], []>} : vector<1x64xf32>, vector<64x256xf32>, vector<1x256xf32> -> vector<1x256xf32>
    %151 = arith.addf %149, %150 : vector<1x256xf32>
    %152 = vector.extract_strided_slice %151 {offsets = [0, 0], sizes = [1, 192], strides = [1, 1]} : vector<1x256xf32> to vector<1x192xf32>
    %153 = arith.negf %152 : vector<1x192xf32>
    %154 = math.exp %153 : vector<1x192xf32>
    %cst_56 = arith.constant 1.000000e+00 : f32
    %155 = vector.broadcast %cst_56 : f32 to vector<1x192xf32>
    %156 = arith.addf %155, %154 : vector<1x192xf32>
    %157 = arith.divf %155, %156 : vector<1x192xf32>
    %158 = vector.extract_strided_slice %157 {offsets = [0, 0], sizes = [1, 64], strides = [1, 1]} : vector<1x192xf32> to vector<1x64xf32>
    %159 = vector.extract_strided_slice %157 {offsets = [0, 64], sizes = [1, 64], strides = [1, 1]} : vector<1x192xf32> to vector<1x64xf32>
    %160 = vector.extract_strided_slice %157 {offsets = [0, 128], sizes = [1, 64], strides = [1, 1]} : vector<1x192xf32> to vector<1x64xf32>
    %161 = vector.extract_strided_slice %151 {offsets = [0, 192], sizes = [1, 64], strides = [1, 1]} : vector<1x256xf32> to vector<1x64xf32>
    %162 = math.tanh %161 : vector<1x64xf32>
    %163 = arith.mulf %159, %144 : vector<1x64xf32>
    %164 = arith.mulf %158, %162 : vector<1x64xf32>
    %165 = arith.addf %163, %164 : vector<1x64xf32>
    %166 = math.tanh %165 : vector<1x64xf32>
    %167 = arith.mulf %160, %166 : vector<1x64xf32>
    %168 = vector.extract_strided_slice %167 {offsets = [0, 0], sizes = [1, 32], strides = [1, 1]} : vector<1x64xf32> to vector<1x32xf32>
    %169 = vector.extract_strided_slice %167 {offsets = [0, 32], sizes = [1, 32], strides = [1, 1]} : vector<1x64xf32> to vector<1x32xf32>
    %170 = vector.extract_strided_slice %82 {offsets = [4, 0], sizes = [1, 256], strides = [1, 1]} : vector<8x256xf32> to vector<1x256xf32>
    %cst_57 = arith.constant dense<0.000000e+00> : vector<1x256xf32>
    %171 = tpu.matmul %167, %83, %cst_57 {dimension_numbers = #tpu.dot_dimension_numbers<[1], [0], [0], [1], [0, 0, 1, 1], [], []>} : vector<1x64xf32>, vector<64x256xf32>, vector<1x256xf32> -> vector<1x256xf32>
    %172 = arith.addf %170, %171 : vector<1x256xf32>
    %173 = vector.extract_strided_slice %172 {offsets = [0, 0], sizes = [1, 192], strides = [1, 1]} : vector<1x256xf32> to vector<1x192xf32>
    %174 = arith.negf %173 : vector<1x192xf32>
    %175 = math.exp %174 : vector<1x192xf32>
    %cst_58 = arith.constant 1.000000e+00 : f32
    %176 = vector.broadcast %cst_58 : f32 to vector<1x192xf32>
    %177 = arith.addf %176, %175 : vector<1x192xf32>
    %178 = arith.divf %176, %177 : vector<1x192xf32>
    %179 = vector.extract_strided_slice %178 {offsets = [0, 0], sizes = [1, 64], strides = [1, 1]} : vector<1x192xf32> to vector<1x64xf32>
    %180 = vector.extract_strided_slice %178 {offsets = [0, 64], sizes = [1, 64], strides = [1, 1]} : vector<1x192xf32> to vector<1x64xf32>
    %181 = vector.extract_strided_slice %178 {offsets = [0, 128], sizes = [1, 64], strides = [1, 1]} : vector<1x192xf32> to vector<1x64xf32>
    %182 = vector.extract_strided_slice %172 {offsets = [0, 192], sizes = [1, 64], strides = [1, 1]} : vector<1x256xf32> to vector<1x64xf32>
    %183 = math.tanh %182 : vector<1x64xf32>
    %184 = arith.mulf %180, %165 : vector<1x64xf32>
    %185 = arith.mulf %179, %183 : vector<1x64xf32>
    %186 = arith.addf %184, %185 : vector<1x64xf32>
    %187 = math.tanh %186 : vector<1x64xf32>
    %188 = arith.mulf %181, %187 : vector<1x64xf32>
    %189 = vector.extract_strided_slice %188 {offsets = [0, 0], sizes = [1, 32], strides = [1, 1]} : vector<1x64xf32> to vector<1x32xf32>
    %190 = vector.extract_strided_slice %188 {offsets = [0, 32], sizes = [1, 32], strides = [1, 1]} : vector<1x64xf32> to vector<1x32xf32>
    %191 = vector.extract_strided_slice %82 {offsets = [5, 0], sizes = [1, 256], strides = [1, 1]} : vector<8x256xf32> to vector<1x256xf32>
    %cst_59 = arith.constant dense<0.000000e+00> : vector<1x256xf32>
    %192 = tpu.matmul %188, %83, %cst_59 {dimension_numbers = #tpu.dot_dimension_numbers<[1], [0], [0], [1], [0, 0, 1, 1], [], []>} : vector<1x64xf32>, vector<64x256xf32>, vector<1x256xf32> -> vector<1x256xf32>
    %193 = arith.addf %191, %192 : vector<1x256xf32>
    %194 = vector.extract_strided_slice %193 {offsets = [0, 0], sizes = [1, 192], strides = [1, 1]} : vector<1x256xf32> to vector<1x192xf32>
    %195 = arith.negf %194 : vector<1x192xf32>
    %196 = math.exp %195 : vector<1x192xf32>
    %cst_60 = arith.constant 1.000000e+00 : f32
    %197 = vector.broadcast %cst_60 : f32 to vector<1x192xf32>
    %198 = arith.addf %197, %196 : vector<1x192xf32>
    %199 = arith.divf %197, %198 : vector<1x192xf32>
    %200 = vector.extract_strided_slice %199 {offsets = [0, 0], sizes = [1, 64], strides = [1, 1]} : vector<1x192xf32> to vector<1x64xf32>
    %201 = vector.extract_strided_slice %199 {offsets = [0, 64], sizes = [1, 64], strides = [1, 1]} : vector<1x192xf32> to vector<1x64xf32>
    %202 = vector.extract_strided_slice %199 {offsets = [0, 128], sizes = [1, 64], strides = [1, 1]} : vector<1x192xf32> to vector<1x64xf32>
    %203 = vector.extract_strided_slice %193 {offsets = [0, 192], sizes = [1, 64], strides = [1, 1]} : vector<1x256xf32> to vector<1x64xf32>
    %204 = math.tanh %203 : vector<1x64xf32>
    %205 = arith.mulf %201, %186 : vector<1x64xf32>
    %206 = arith.mulf %200, %204 : vector<1x64xf32>
    %207 = arith.addf %205, %206 : vector<1x64xf32>
    %208 = math.tanh %207 : vector<1x64xf32>
    %209 = arith.mulf %202, %208 : vector<1x64xf32>
    %210 = vector.extract_strided_slice %209 {offsets = [0, 0], sizes = [1, 32], strides = [1, 1]} : vector<1x64xf32> to vector<1x32xf32>
    %211 = vector.extract_strided_slice %209 {offsets = [0, 32], sizes = [1, 32], strides = [1, 1]} : vector<1x64xf32> to vector<1x32xf32>
    %212 = vector.extract_strided_slice %82 {offsets = [6, 0], sizes = [1, 256], strides = [1, 1]} : vector<8x256xf32> to vector<1x256xf32>
    %cst_61 = arith.constant dense<0.000000e+00> : vector<1x256xf32>
    %213 = tpu.matmul %209, %83, %cst_61 {dimension_numbers = #tpu.dot_dimension_numbers<[1], [0], [0], [1], [0, 0, 1, 1], [], []>} : vector<1x64xf32>, vector<64x256xf32>, vector<1x256xf32> -> vector<1x256xf32>
    %214 = arith.addf %212, %213 : vector<1x256xf32>
    %215 = vector.extract_strided_slice %214 {offsets = [0, 0], sizes = [1, 192], strides = [1, 1]} : vector<1x256xf32> to vector<1x192xf32>
    %216 = arith.negf %215 : vector<1x192xf32>
    %217 = math.exp %216 : vector<1x192xf32>
    %cst_62 = arith.constant 1.000000e+00 : f32
    %218 = vector.broadcast %cst_62 : f32 to vector<1x192xf32>
    %219 = arith.addf %218, %217 : vector<1x192xf32>
    %220 = arith.divf %218, %219 : vector<1x192xf32>
    %221 = vector.extract_strided_slice %220 {offsets = [0, 0], sizes = [1, 64], strides = [1, 1]} : vector<1x192xf32> to vector<1x64xf32>
    %222 = vector.extract_strided_slice %220 {offsets = [0, 64], sizes = [1, 64], strides = [1, 1]} : vector<1x192xf32> to vector<1x64xf32>
    %223 = vector.extract_strided_slice %220 {offsets = [0, 128], sizes = [1, 64], strides = [1, 1]} : vector<1x192xf32> to vector<1x64xf32>
    %224 = vector.extract_strided_slice %214 {offsets = [0, 192], sizes = [1, 64], strides = [1, 1]} : vector<1x256xf32> to vector<1x64xf32>
    %225 = math.tanh %224 : vector<1x64xf32>
    %226 = arith.mulf %222, %207 : vector<1x64xf32>
    %227 = arith.mulf %221, %225 : vector<1x64xf32>
    %228 = arith.addf %226, %227 : vector<1x64xf32>
    %229 = math.tanh %228 : vector<1x64xf32>
    %230 = arith.mulf %223, %229 : vector<1x64xf32>
    %231 = vector.extract_strided_slice %230 {offsets = [0, 0], sizes = [1, 32], strides = [1, 1]} : vector<1x64xf32> to vector<1x32xf32>
    %232 = vector.extract_strided_slice %230 {offsets = [0, 32], sizes = [1, 32], strides = [1, 1]} : vector<1x64xf32> to vector<1x32xf32>
    %233 = vector.extract_strided_slice %82 {offsets = [7, 0], sizes = [1, 256], strides = [1, 1]} : vector<8x256xf32> to vector<1x256xf32>
    %cst_63 = arith.constant dense<0.000000e+00> : vector<1x256xf32>
    %234 = tpu.matmul %230, %83, %cst_63 {dimension_numbers = #tpu.dot_dimension_numbers<[1], [0], [0], [1], [0, 0, 1, 1], [], []>} : vector<1x64xf32>, vector<64x256xf32>, vector<1x256xf32> -> vector<1x256xf32>
    %235 = arith.addf %233, %234 : vector<1x256xf32>
    %236 = vector.extract_strided_slice %235 {offsets = [0, 0], sizes = [1, 192], strides = [1, 1]} : vector<1x256xf32> to vector<1x192xf32>
    %237 = arith.negf %236 : vector<1x192xf32>
    %238 = math.exp %237 : vector<1x192xf32>
    %cst_64 = arith.constant 1.000000e+00 : f32
    %239 = vector.broadcast %cst_64 : f32 to vector<1x192xf32>
    %240 = arith.addf %239, %238 : vector<1x192xf32>
    %241 = arith.divf %239, %240 : vector<1x192xf32>
    %242 = vector.extract_strided_slice %241 {offsets = [0, 0], sizes = [1, 64], strides = [1, 1]} : vector<1x192xf32> to vector<1x64xf32>
    %243 = vector.extract_strided_slice %241 {offsets = [0, 64], sizes = [1, 64], strides = [1, 1]} : vector<1x192xf32> to vector<1x64xf32>
    %244 = vector.extract_strided_slice %241 {offsets = [0, 128], sizes = [1, 64], strides = [1, 1]} : vector<1x192xf32> to vector<1x64xf32>
    %245 = vector.extract_strided_slice %235 {offsets = [0, 192], sizes = [1, 64], strides = [1, 1]} : vector<1x256xf32> to vector<1x64xf32>
    %246 = math.tanh %245 : vector<1x64xf32>
    %247 = arith.mulf %243, %228 : vector<1x64xf32>
    %248 = arith.mulf %242, %246 : vector<1x64xf32>
    %249 = arith.addf %247, %248 : vector<1x64xf32>
    %250 = math.tanh %249 : vector<1x64xf32>
    %251 = arith.mulf %244, %250 : vector<1x64xf32>
    %252 = vector.extract_strided_slice %251 {offsets = [0, 0], sizes = [1, 32], strides = [1, 1]} : vector<1x64xf32> to vector<1x32xf32>
    %253 = vector.extract_strided_slice %251 {offsets = [0, 32], sizes = [1, 32], strides = [1, 1]} : vector<1x64xf32> to vector<1x32xf32>
    %254 = tpu.concatenate %105, %126, %147, %168, %189, %210, %231, %252 in 0 : vector<1x32xf32>, vector<1x32xf32>, vector<1x32xf32>, vector<1x32xf32>, vector<1x32xf32>, vector<1x32xf32>, vector<1x32xf32>, vector<1x32xf32> -> vector<8x32xf32>
    %255 = tpu.concatenate %253, %232, %211, %190, %169, %148, %127, %106 in 0 : vector<1x32xf32>, vector<1x32xf32>, vector<1x32xf32>, vector<1x32xf32>, vector<1x32xf32>, vector<1x32xf32>, vector<1x32xf32>, vector<1x32xf32> -> vector<8x32xf32>
    %256 = tpu.concatenate %254, %255 in 1 : vector<8x32xf32>, vector<8x32xf32> -> vector<8x64xf32>
    %c0_65 = arith.constant 0 : index
    %c0_66 = arith.constant 0 : index
    %257 = vector.load %arg11[%c0_65, %c0_66] : memref<8x64xf32, #tpu.memory_space<vmem>>, vector<8x64xf32>
    tpu.vector_store %arg11[%c0_65, %c0_66], %256 {strides = array<i32>} : memref<8x64xf32, #tpu.memory_space<vmem>>, vector<8x64xf32>,
    %258 = tpu.concatenate %251, %249 in 0 : vector<1x64xf32>, vector<1x64xf32> -> vector<2x64xf32>
    %c0_67 = arith.constant 0 : index
    %c0_68 = arith.constant 0 : index
    %259 = vector.load %arg12[%c0_67, %c0_68] : memref<2x64xf32, #tpu.memory_space<vmem>>, vector<2x64xf32>
    tpu.vector_store %arg12[%c0_67, %c0_68], %258 {strides = array<i32>} : memref<2x64xf32, #tpu.memory_space<vmem>>, vector<2x64xf32>,
    return
  }
}

</mosaic_0001>

<llo_original>
// kernel: tpu_custom_call.1
$region0: #{tpu_custom_call.1}
  #allocation0 [shape = 'u32[]', space=smem, size = 0x4, offset = 0x4, fixed_abs, tag = 'smem constant byte address 0x4 - core index']
  #allocation1 [shape = 'u32[144,128]{1,0:T(1,128)}', space=vmem, size = 0x12000, scoped, tag = 'internal scratch']
  %s0 = inlined_call_operand.vmem [shape: s32[10], index: 0, kind: input, shape index: {}]
  %s1 = inlined_call_operand.vmem [shape: s32[12], index: 1, kind: input, shape index: {}]
  %s2 = inlined_call_operand.vmem [shape: f32[50,32], index: 2, kind: input, shape index: {}]
  %s3 = inlined_call_operand.vmem [shape: f32[50,16], index: 3, kind: input, shape index: {}]
  %s4 = inlined_call_operand.vmem [shape: f32[12,12], index: 4, kind: input, shape index: {}]
  %s5 = inlined_call_operand.vmem [shape: f32[16,32], index: 5, kind: input, shape index: {}]
  %s6 = inlined_call_operand.vmem [shape: f32[1,32], index: 6, kind: input, shape index: {}]
  %s7 = inlined_call_operand.vmem [shape: f32[64,256], index: 7, kind: input, shape index: {}]
  %s8 = inlined_call_operand.hbm [shape: f32[64,256], index: 8, kind: input, shape index: {}]
  %s9 = inlined_call_operand.vmem [shape: f32[1,256], index: 9, kind: input, shape index: {}]
  %s10 = inlined_call_operand.hbm [shape: f32[1,32], index: 10, kind: output, shape index: {0}]
  %s11 = inlined_call_operand.hbm [shape: f32[8,64], index: 11, kind: output, shape index: {1}]
  %s12 = inlined_call_operand.hbm [shape: f32[2,64], index: 12, kind: output, shape index: {2}]
  %13 = xla_tuple %s10, %s11, %s12
  %s14 = sld [smem:[#allocation0]]
  $region78: #{tpu_custom_call.1} parent=0
    _
  %s16 = ssub.s32 1, %s14
  %s17 = scalar_select 0, %s16, %s14
  $region1: #{tpu_custom_call.1} parent=0
    #allocation2 [shape = 'u8[512]{0}', space=smem, size = 0x200, scoped, tag = 'input window, operand 0, single buffered']
    #allocation3 [shape = 's32[1]{0}', space=sflag, size = 0x4, scoped, tag = 'scoped memory for tpu_custom_call.1']
    #allocation4 [shape = 's32[1]{0}', space=sflag, size = 0x4, scoped, tag = 'scoped memory for tpu_custom_call.1']
    #allocation5 [shape = 's32[1]{0}', space=sflag, size = 0x4, scoped, tag = 'scoped memory for tpu_custom_call.1']
    #allocation6 [shape = 'u8[512]{0}', space=smem, size = 0x200, scoped, tag = 'input window, operand 1, single buffered']
    #allocation7 [shape = 's32[1]{0}', space=sflag, size = 0x4, scoped, tag = 'scoped memory for tpu_custom_call.1']
    #allocation8 [shape = 'u8[65536]{0}', space=vmem, size = 0x10000, scoped, tag = 'input window, operand 8, single buffered']
    #allocation9 [shape = 'u8[512]{0}', space=vmem, size = 0x400, scoped, tag = 'output window, operand 0, single buffered']
    #allocation10 [shape = 'u8[4096]{0}', space=vmem, size = 0x1000, scoped, tag = 'output window, operand 1, single buffered']
    #allocation11 [shape = 's32[1]{0}', space=sflag, size = 0x4, scoped, tag = 'scoped memory for tpu_custom_call.1']
    #allocation12 [shape = 'u8[1024]{0}', space=vmem, size = 0x400, scoped, tag = 'output window, operand 2, single buffered']
    %18 = vsyncpa [#allocation5], 0
    %19 = vsyncpa [#allocation7], 0
    %20 = vsyncpa [#allocation3], 0
    %21 = vsyncpa [#allocation4], 0
    %22 = vsyncpa [#allocation11], 0
    // Predicated region
    $region2: #{tpu_custom_call.1} parent=1 // pred_check
      _
    $region3: #{tpu_custom_call.1} parent=1 // pred_check_branch
      %24 = sbr.rel (0) target = $region5
    $region4: #{tpu_custom_call.1} parent=1 // pred_region
      %s26 = ssub.s32 16, 16
      %27 = vsyncadd [#allocation5], %s26
      %s29 = sshll.u32 %s0, 4
      %s30 = int_to_ptr.vmem [resolvable:$true] %s29
      %32 = dma.vmem_to_smem %s30, 16, [#allocation2], [#allocation5]
    $region5: #{tpu_custom_call.1} parent=1 // pred_fallthru
      _
    // Predicated region
    $region6: #{tpu_custom_call.1} parent=1 // pred_check
      _
    $region7: #{tpu_custom_call.1} parent=1 // pred_check_branch
      %34 = sbr.rel (0) target = $region9
    $region8: #{tpu_custom_call.1} parent=1 // pred_region
      %s36 = ssub.s32 16, 16
      %37 = vsyncadd [#allocation7], %s36
      %s39 = sshll.u32 %s1, 4
      %s40 = int_to_ptr.vmem [resolvable:$true] %s39
      %42 = dma.vmem_to_smem %s40, 16, [#allocation6], [#allocation7]
    $region9: #{tpu_custom_call.1} parent=1 // pred_fallthru
      _
    // Predicated region
    $region10: #{tpu_custom_call.1} parent=1 // pred_check
      _
    $region11: #{tpu_custom_call.1} parent=1 // pred_check_branch
      %44 = sbr.rel (0) target = $region13
    $region12: #{tpu_custom_call.1} parent=1 // pred_region
      _
    $region13: #{tpu_custom_call.1} parent=1 // pred_fallthru
      _
    // Predicated region
    $region14: #{tpu_custom_call.1} parent=1 // pred_check
      _
    $region15: #{tpu_custom_call.1} parent=1 // pred_check_branch
      %46 = sbr.rel (0) target = $region17
    $region16: #{tpu_custom_call.1} parent=1 // pred_region
      _
    $region17: #{tpu_custom_call.1} parent=1 // pred_fallthru
      _
    // Predicated region
    $region18: #{tpu_custom_call.1} parent=1 // pred_check
      _
    $region19: #{tpu_custom_call.1} parent=1 // pred_check_branch
      %48 = sbr.rel (0) target = $region21
    $region20: #{tpu_custom_call.1} parent=1 // pred_region
      _
    $region21: #{tpu_custom_call.1} parent=1 // pred_fallthru
      _
    // Predicated region
    $region22: #{tpu_custom_call.1} parent=1 // pred_check
      _
    $region23: #{tpu_custom_call.1} parent=1 // pred_check_branch
      %50 = sbr.rel (0) target = $region25
    $region24: #{tpu_custom_call.1} parent=1 // pred_region
      _
    $region25: #{tpu_custom_call.1} parent=1 // pred_fallthru
      _
    // Predicated region
    $region26: #{tpu_custom_call.1} parent=1 // pred_check
      _
    $region27: #{tpu_custom_call.1} parent=1 // pred_check_branch
      %52 = sbr.rel (0) target = $region29
    $region28: #{tpu_custom_call.1} parent=1 // pred_region
      _
    $region29: #{tpu_custom_call.1} parent=1 // pred_fallthru
      _
    // Predicated region
    $region30: #{tpu_custom_call.1} parent=1 // pred_check
      _
    $region31: #{tpu_custom_call.1} parent=1 // pred_check_branch
      %54 = sbr.rel (0) target = $region33
    $region32: #{tpu_custom_call.1} parent=1 // pred_region
      _
    $region33: #{tpu_custom_call.1} parent=1 // pred_fallthru
      _
    // Predicated region
    $region34: #{tpu_custom_call.1} parent=1 // pred_check
      _
    $region35: #{tpu_custom_call.1} parent=1 // pred_check_branch
      %56 = sbr.rel (0) target = $region37
    $region36: #{tpu_custom_call.1} parent=1 // pred_region
      %s58 = ssub.s32 2048, 2048
      %59 = vsyncadd [#allocation3], %s58
      %s60 = sshll.u32 [#allocation8], 4
      %s61 = int_to_ptr.vmem [resolvable:$true] %s60
      %66 = dma.hbm_to_vmem [thread:$0]  %s8, 2048, %s61, [#allocation3], 256, 256, 16
    $region37: #{tpu_custom_call.1} parent=1 // pred_fallthru
      _
    // Predicated region
    $region38: #{tpu_custom_call.1} parent=1 // pred_check
      _
    $region39: #{tpu_custom_call.1} parent=1 // pred_check_branch
      %68 = sbr.rel (0) target = $region41
    $region40: #{tpu_custom_call.1} parent=1 // pred_region
      _
    $region41: #{tpu_custom_call.1} parent=1 // pred_fallthru
      _
    // Predicated region
    $region42: #{tpu_custom_call.1} parent=1 // pred_check
      _
    $region43: #{tpu_custom_call.1} parent=1 // pred_check_branch
      %70 = sbr.rel (0) target = $region45
    $region44: #{tpu_custom_call.1} parent=1 // pred_region
      %71 = dma.done [#allocation5], 16
    $region45: #{tpu_custom_call.1} parent=1 // pred_fallthru
      _
    // Predicated region
    $region46: #{tpu_custom_call.1} parent=1 // pred_check
      _
    $region47: #{tpu_custom_call.1} parent=1 // pred_check_branch
      %73 = sbr.rel (0) target = $region49
    $region48: #{tpu_custom_call.1} parent=1 // pred_region
      %74 = dma.done [#allocation7], 16
    $region49: #{tpu_custom_call.1} parent=1 // pred_fallthru
      _
    // Predicated region
    $region50: #{tpu_custom_call.1} parent=1 // pred_check
      _
    $region51: #{tpu_custom_call.1} parent=1 // pred_check_branch
      %76 = sbr.rel (0) target = $region53
    $region52: #{tpu_custom_call.1} parent=1 // pred_region
      %77 = dma.done [#allocation3], 2048
    $region53: #{tpu_custom_call.1} parent=1 // pred_fallthru
      _
    %78 = sfence
    %s79 = sld [smem:[#allocation6]]
    %s80 = scalar_lea.vmem %s3, %s79
    %v81 = vld [vmem:[%s80] sm:$0x1]
    %s82 = sld [smem:[#allocation6 + $0x1]]
    %s83 = scalar_lea.vmem %s3, %s82
    %v84 = vld [vmem:[%s83] sm:$0x1]
    %s85 = sld [smem:[#allocation6 + $0x2]]
    %s86 = scalar_lea.vmem %s3, %s85
    %v87 = vld [vmem:[%s86] sm:$0x1]
    %s88 = sld [smem:[#allocation6 + $0x3]]
    %s89 = scalar_lea.vmem %s3, %s88
    %v90 = vld [vmem:[%s89] sm:$0x1]
    %s91 = sld [smem:[#allocation6 + $0x4]]
    %s92 = scalar_lea.vmem %s3, %s91
    %v93 = vld [vmem:[%s92] sm:$0x1]
    %s94 = sld [smem:[#allocation6 + $0x5]]
    %s95 = scalar_lea.vmem %s3, %s94
    %v96 = vld [vmem:[%s95] sm:$0x1]
    %s97 = sld [smem:[#allocation6 + $0x6]]
    %s98 = scalar_lea.vmem %s3, %s97
    %v99 = vld [vmem:[%s98] sm:$0x1]
    %s100 = sld [smem:[#allocation6 + $0x7]]
    %s101 = scalar_lea.vmem %s3, %s100
    %v102 = vld [vmem:[%s101] sm:$0x1]
    %s103 = sld [smem:[#allocation6 + $0x8]]
    %s104 = scalar_lea.vmem %s3, %s103
    %v105 = vld [vmem:[%s104] sm:$0x1]
    %s106 = sld [smem:[#allocation6 + $0x9]]
    %s107 = scalar_lea.vmem %s3, %s106
    %v108 = vld [vmem:[%s107] sm:$0x1]
    %s109 = sld [smem:[#allocation6 + $0xa]]
    %s110 = scalar_lea.vmem %s3, %s109
    %v111 = vld [vmem:[%s110] sm:$0x1]
    %s112 = sld [smem:[#allocation6 + $0xb]]
    %s113 = scalar_lea.vmem %s3, %s112
    %v114 = vld [vmem:[%s113] sm:$0x1]
    %v116 = vrot.slane %v84, 7
    %v119 = vrot.slane %v87, 6
    %v122 = vrot.slane %v90, 5
    %v125 = vrot.slane %v93, 4
    %v128 = vrot.slane %v96, 3
    %v131 = vrot.slane %v99, 2
    %v134 = vrot.slane %v102, 1
    %v137 = vrot.slane %v108, 7
    %v140 = vrot.slane %v111, 6
    %v143 = vrot.slane %v114, 5
    %vm145 = vcmask 1040384
    %v146 = vsel %vm145, %v81, %v116
    %vm147 = vcmask 1041408
    %v148 = vsel %vm147, %v146, %v119
    %vm149 = vcmask 1042432
    %v150 = vsel %vm149, %v148, %v122
    %vm151 = vcmask 1043456
    %v152 = vsel %vm151, %v150, %v125
    %vm153 = vcmask 1044480
    %v154 = vsel %vm153, %v152, %v128
    %vm155 = vcmask 1045504
    %v156 = vsel %vm155, %v154, %v131
    %vm157 = vcmask 1046528
    %v158 = vsel %vm157, %v156, %v134
    %v159 = vsel %vm145, %v105, %v137
    %v160 = vsel %vm147, %v159, %v140
    %v161 = vsel %vm149, %v160, %v143
    %v162 = vld [vmem:[%s5] sm:$0xff]
    %v163 = vld [vmem:[%s5 + $0x8] sm:$0xff]
    %vm164 = vcmask 130048
    %v166 = vsel %vm164, %v158, 0
    %v169 = vsel %vm164, %v161, 0
    %171 = vmatprep.subr.mxu0 0.0
    %172 = vmatpush1.msra.mxu0 %v162
    %173 = vmatprep.subr.mxu0 0.0
    %174 = vmatpush1.msra.mxu0 %v163
    %175 = vmatprep.subr.mxu0 0.0
    %176 = vmatpush1.msra.mxu0 0.0
    %177 = vmatprep.subr.mxu0 0.0
    %178 = vmatpush1.msra.mxu0 0.0
    %179 = vmatprep.subr.mxu0 0.0
    %180 = vmatpush1.msra.mxu0 0.0
    %181 = vmatprep.subr.mxu0 0.0
    %182 = vmatpush1.msra.mxu0 0.0
    %183 = vmatprep.subr.mxu0 0.0
    %184 = vmatpush1.msra.mxu0 0.0
    %185 = vmatprep.subr.mxu0 0.0
    %186 = vmatpush1.msra.mxu0 0.0
    %187 = vmatprep.subr.mxu0 0.0
    %188 = vmatpush1.msra.mxu0 0.0
    %189 = vmatprep.subr.mxu0 0.0
    %190 = vmatpush1.msra.mxu0 0.0
    %191 = vmatprep.subr.mxu0 0.0
    %192 = vmatpush1.msra.mxu0 0.0
    %193 = vmatprep.subr.mxu0 0.0
    %194 = vmatpush1.msra.mxu0 0.0
    %195 = vmatprep.subr.mxu0 0.0
    %196 = vmatpush1.msra.mxu0 0.0
    %197 = vmatprep.subr.mxu0 0.0
    %198 = vmatpush1.msra.mxu0 0.0
    %199 = vmatprep.subr.mxu0 0.0
    %200 = vmatpush1.msra.mxu0 0.0
    %201 = vmatprep.subr.mxu0 0.0
    %202 = vmatpush1.msra.mxu0 0.0
    %203 = vmatprep.subr.mxu0 0.0
    %204 = vmatpush1.msra.mxu0 0.0
    %205 = vmatprep.subr.mxu0 0.0
    %206 = vmatpush1.msra.mxu0 0.0
    %207 = vmatprep.subr.mxu0 0.0
    %208 = vmatpush1.msra.mxu0 0.0
    %209 = vmatprep.subr.mxu0 0.0
    %210 = vmatpush1.msra.mxu0 0.0
    %211 = vmatprep.subr.mxu0 0.0
    %212 = vmatpush1.msra.mxu0 0.0
    %213 = vmatprep.subr.mxu0 0.0
    %214 = vmatpush1.msra.mxu0 0.0
    %215 = vmatprep.subr.mxu0 0.0
    %216 = vmatpush1.msra.mxu0 0.0
    %217 = vmatprep.subr.mxu0 0.0
    %218 = vmatpush1.msra.mxu0 0.0
    %219 = vmatprep.subr.mxu0 0.0
    %220 = vmatpush1.msra.mxu0 0.0
    %221 = vmatprep.subr.mxu0 0.0
    %222 = vmatpush1.msra.mxu0 0.0
    %223 = vmatprep.subr.mxu0 0.0
    %224 = vmatpush1.msra.mxu0 0.0
    %225 = vmatprep.subr.mxu0 0.0
    %226 = vmatpush1.msra.mxu0 0.0
    %227 = vmatprep.subr.mxu0 0.0
    %228 = vmatpush1.msra.mxu0 0.0
    %229 = vmatprep.subr.mxu0 0.0
    %230 = vmatpush1.msra.mxu0 0.0
    %231 = vmatprep.subr.mxu0 0.0
    %232 = vmatpush1.msra.mxu0 0.0
    %233 = vmatprep.subr.mxu0 0.0
    %234 = vmatpush1.msra.mxu0 0.0
    %235 = vmatprep.mubr.f32.mxu0 0.0
    %236 = vmatmul.mubr.f32.gmra.mrb[0].mxu0 %v166
    %v237 = vpop.f32.mrb[0].mxu0
    %v238 = vadd.f32 0.0, %v237
    %v239 = vpop.f32.mrb[0].mxu0
    %240 = vmatprep.mubr.f32.mxu0 0.0
    %241 = vmatmul.mubr.f32.gmra.mrb[0].mxu0 %v169
    %v242 = vpop.f32.mrb[0].mxu0
    %v243 = vadd.f32 0.0, %v242
    %v244 = vpop.f32.mrb[0].mxu0
    %245 = vdwg.mxu0
    %v246 = vld [vmem:[%s4] sm:$0xff]
    %v247 = vld [vmem:[%s4 + $0x8] sm:$0xf]
    %v248 = vld [vmem:[%s6] sm:$0x1]
    %v250 = vlaneseq
    %v251 = vshrl.u32 %v250, 7
    %v252 = vsub.s32 0, %v251
    %v253 = vrot.slane %v248, %v252
    %vm255 = vcmask 97280
    %v257 = vsel %vm255, %v246, 0
    %v260 = vsel %vm255, %v247, 0
    %v263 = vsel %vm151, %v243, 0
    %265 = vmatprep.subr.mxu0 0.0
    %266 = vmatpush1.msra.mxu0 %v238
    %267 = vmatprep.subr.mxu0 0.0
    %268 = vmatpush1.msra.mxu0 %v263
    %269 = vmatprep.subr.mxu0 0.0
    %270 = vmatpush1.msra.mxu0 0.0
    %271 = vmatprep.subr.mxu0 0.0
    %272 = vmatpush1.msra.mxu0 0.0
    %273 = vmatprep.subr.mxu0 0.0
    %274 = vmatpush1.msra.mxu0 0.0
    %275 = vmatprep.subr.mxu0 0.0
    %276 = vmatpush1.msra.mxu0 0.0
    %277 = vmatprep.subr.mxu0 0.0
    %278 = vmatpush1.msra.mxu0 0.0
    %279 = vmatprep.subr.mxu0 0.0
    %280 = vmatpush1.msra.mxu0 0.0
    %281 = vmatprep.subr.mxu0 0.0
    %282 = vmatpush1.msra.mxu0 0.0
    %283 = vmatprep.subr.mxu0 0.0
    %284 = vmatpush1.msra.mxu0 0.0
    %285 = vmatprep.subr.mxu0 0.0
    %286 = vmatpush1.msra.mxu0 0.0
    %287 = vmatprep.subr.mxu0 0.0
    %288 = vmatpush1.msra.mxu0 0.0
    %289 = vmatprep.subr.mxu0 0.0
    %290 = vmatpush1.msra.mxu0 0.0
    %291 = vmatprep.subr.mxu0 0.0
    %292 = vmatpush1.msra.mxu0 0.0
    %293 = vmatprep.subr.mxu0 0.0
    %294 = vmatpush1.msra.mxu0 0.0
    %295 = vmatprep.subr.mxu0 0.0
    %296 = vmatpush1.msra.mxu0 0.0
    %297 = vmatprep.subr.mxu0 0.0
    %298 = vmatpush1.msra.mxu0 0.0
    %299 = vmatprep.subr.mxu0 0.0
    %300 = vmatpush1.msra.mxu0 0.0
    %301 = vmatprep.subr.mxu0 0.0
    %302 = vmatpush1.msra.mxu0 0.0
    %303 = vmatprep.subr.mxu0 0.0
    %304 = vmatpush1.msra.mxu0 0.0
    %305 = vmatprep.subr.mxu0 0.0
    %306 = vmatpush1.msra.mxu0 0.0
    %307 = vmatprep.subr.mxu0 0.0
    %308 = vmatpush1.msra.mxu0 0.0
    %309 = vmatprep.subr.mxu0 0.0
    %310 = vmatpush1.msra.mxu0 0.0
    %311 = vmatprep.subr.mxu0 0.0
    %312 = vmatpush1.msra.mxu0 0.0
    %313 = vmatprep.subr.mxu0 0.0
    %314 = vmatpush1.msra.mxu0 0.0
    %315 = vmatprep.subr.mxu0 0.0
    %316 = vmatpush1.msra.mxu0 0.0
    %317 = vmatprep.subr.mxu0 0.0
    %318 = vmatpush1.msra.mxu0 0.0
    %319 = vmatprep.subr.mxu0 0.0
    %320 = vmatpush1.msra.mxu0 0.0
    %321 = vmatprep.subr.mxu0 0.0
    %322 = vmatpush1.msra.mxu0 0.0
    %323 = vmatprep.subr.mxu0 0.0
    %324 = vmatpush1.msra.mxu0 0.0
    %325 = vmatprep.subr.mxu0 0.0
    %326 = vmatpush1.msra.mxu0 0.0
    %327 = vmatprep.subr.mxu0 0.0
    %328 = vmatpush1.msra.mxu0 0.0
    %329 = vmatprep.mubr.f32.mxu0 0.0
    %330 = vmatmul.mubr.f32.gmra.mrb[0].mxu0 %v257
    %v331 = vpop.f32.mrb[0].mxu0
    %v332 = vadd.f32 %v253, %v331
    %v333 = vpop.f32.mrb[0].mxu0
    %334 = vmatprep.mubr.f32.mxu0 0.0
    %335 = vmatmul.mubr.f32.gmra.mrb[0].mxu0 %v260
    %v336 = vpop.f32.mrb[0].mxu0
    %v337 = vadd.f32 %v253, %v336
    %v338 = vpop.f32.mrb[0].mxu0
    %339 = vdwg.mxu0
    %v340 = vmax.f32 %v332, 0.0
    %v341 = vmax.f32 %v337, 0.0
    %vm342 = vcmask 261120
    %v343 = vsel %vm342, %v340, 0.0
    %vm344 = vcmask 257024
    %v345 = vsel %vm344, %v341, 0.0
    %v346 = vadd.f32 %v343, %v345
    %v347 = vrot.slane %v346, 4
    %v348 = vadd.f32 %v346, %v347
    %v349 = vrot.slane %v348, 2
    %v350 = vadd.f32 %v348, %v349
    %v351 = vrot.slane %v350, 1
    %v352 = vadd.f32 %v350, %v351
    %v353 = vrcp.pop 12.0
    %v354 = vmul.f32 %v352, %v353
    %vm355 = vcmask 253952
    %356 = vst.msk [vmem:[#allocation9] sm:$0x1] %vm355, %v354
    %s357 = sld [smem:[#allocation2]]
    %s358 = scalar_lea.vmem %s2, %s357
    %v359 = vld [vmem:[%s358] sm:$0x1]
    %s360 = sld [smem:[#allocation2 + $0x1]]
    %s361 = scalar_lea.vmem %s2, %s360
    %v362 = vld [vmem:[%s361] sm:$0x1]
    %s363 = sld [smem:[#allocation2 + $0x2]]
    %s364 = scalar_lea.vmem %s2, %s363
    %v365 = vld [vmem:[%s364] sm:$0x1]
    %s366 = sld [smem:[#allocation2 + $0x3]]
    %s367 = scalar_lea.vmem %s2, %s366
    %v368 = vld [vmem:[%s367] sm:$0x1]
    %s369 = sld [smem:[#allocation2 + $0x4]]
    %s370 = scalar_lea.vmem %s2, %s369
    %v371 = vld [vmem:[%s370] sm:$0x1]
    %s372 = sld [smem:[#allocation2 + $0x5]]
    %s373 = scalar_lea.vmem %s2, %s372
    %v374 = vld [vmem:[%s373] sm:$0x1]
    %s375 = sld [smem:[#allocation2 + $0x6]]
    %s376 = scalar_lea.vmem %s2, %s375
    %v377 = vld [vmem:[%s376] sm:$0x1]
    %s378 = sld [smem:[#allocation2 + $0x7]]
    %s379 = scalar_lea.vmem %s2, %s378
    %v380 = vld [vmem:[%s379] sm:$0x1]
    %v382 = vrot.slane %v362, 7
    %v385 = vrot.slane %v365, 6
    %v388 = vrot.slane %v368, 5
    %v391 = vrot.slane %v371, 4
    %v394 = vrot.slane %v374, 3
    %v397 = vrot.slane %v377, 2
    %v400 = vrot.slane %v380, 1
    %v402 = vsel %vm145, %v359, %v382
    %v403 = vsel %vm147, %v402, %v385
    %v404 = vsel %vm149, %v403, %v388
    %v405 = vsel %vm151, %v404, %v391
    %v406 = vsel %vm153, %v405, %v394
    %v407 = vsel %vm155, %v406, %v397
    %v408 = vsel %vm157, %v407, %v400
    %v409 = vrot.slane %v377, 7
    %v411 = vrot.slane %v374, 6
    %v413 = vrot.slane %v371, 5
    %v415 = vrot.slane %v368, 4
    %v417 = vrot.slane %v365, 3
    %v419 = vrot.slane %v362, 2
    %v422 = vrot.slane %v359, 1
    %v424 = vsel %vm145, %v380, %v409
    %v425 = vsel %vm147, %v424, %v411
    %v426 = vsel %vm149, %v425, %v413
    %v427 = vsel %vm151, %v426, %v415
    %v428 = vsel %vm153, %v427, %v417
    %v429 = vsel %vm155, %v428, %v419
    %v430 = vsel %vm157, %v429, %v422
    %432 = vrot.lane.b32.xlu0 %v430, 32
    %v433 = vpop.permute.xlu0 %432
    %v435 = vsel %vm342, %v408, %v433
    %v436 = vld [vmem:[%s7] sm:$0xff]
    %v437 = vld [vmem:[%s7 + $0x8] sm:$0xff]
    %v438 = vld [vmem:[%s7 + $0x10] sm:$0xff]
    %v439 = vld [vmem:[%s7 + $0x18] sm:$0xff]
    %v440 = vld [vmem:[%s7 + $0x20] sm:$0xff]
    %v441 = vld [vmem:[%s7 + $0x28] sm:$0xff]
    %v442 = vld [vmem:[%s7 + $0x30] sm:$0xff]
    %v443 = vld [vmem:[%s7 + $0x38] sm:$0xff]
    %v444 = vld [vmem:[%s7 + $0x40] sm:$0xff]
    %v445 = vld [vmem:[%s7 + $0x48] sm:$0xff]
    %v446 = vld [vmem:[%s7 + $0x50] sm:$0xff]
    %v447 = vld [vmem:[%s7 + $0x58] sm:$0xff]
    %v448 = vld [vmem:[%s7 + $0x60] sm:$0xff]
    %v449 = vld [vmem:[%s7 + $0x68] sm:$0xff]
    %v450 = vld [vmem:[%s7 + $0x70] sm:$0xff]
    %v451 = vld [vmem:[%s7 + $0x78] sm:$0xff]
    %v452 = vld [vmem:[%s9] sm:$0x3]
    %v454 = vlaneseq
    %v455 = vshrl.u32 %v454, 7
    %v456 = vsub.s32 0, %v455
    %v457 = vrot.slane %v452, %v456
    %v458 = vlaneseq
    %v459 = vshrl.u32 %v458, 7
    %v460 = vsub.s32 1, %v459
    %v461 = vrot.slane %v452, %v460
    %vm464 = vcmask 523264
    %v466 = vsel %vm464, %v435, 0
    %468 = vmatprep.subr.mxu0 %v437
    %469 = vmatpush1.msra.mxu0 %v436
    %470 = vmatprep.subr.mxu0 %v439
    %471 = vmatpush1.msra.mxu0 %v438
    %472 = vmatprep.subr.mxu0 %v441
    %473 = vmatpush1.msra.mxu0 %v440
    %474 = vmatprep.subr.mxu0 %v443
    %475 = vmatpush1.msra.mxu0 %v442
    %476 = vmatprep.subr.mxu0 %v445
    %477 = vmatpush1.msra.mxu0 %v444
    %478 = vmatprep.subr.mxu0 %v447
    %479 = vmatpush1.msra.mxu0 %v446
    %480 = vmatprep.subr.mxu0 %v449
    %481 = vmatpush1.msra.mxu0 %v448
    %482 = vmatprep.subr.mxu0 %v451
    %483 = vmatpush1.msra.mxu0 %v450
    %484 = vmatprep.subr.mxu0 0.0
    %485 = vmatpush1.msra.mxu0 0.0
    %486 = vmatprep.subr.mxu0 0.0
    %487 = vmatpush1.msra.mxu0 0.0
    %488 = vmatprep.subr.mxu0 0.0
    %489 = vmatpush1.msra.mxu0 0.0
    %490 = vmatprep.subr.mxu0 0.0
    %491 = vmatpush1.msra.mxu0 0.0
    %492 = vmatprep.subr.mxu0 0.0
    %493 = vmatpush1.msra.mxu0 0.0
    %494 = vmatprep.subr.mxu0 0.0
    %495 = vmatpush1.msra.mxu0 0.0
    %496 = vmatprep.subr.mxu0 0.0
    %497 = vmatpush1.msra.mxu0 0.0
    %498 = vmatprep.subr.mxu0 0.0
    %499 = vmatpush1.msra.mxu0 0.0
    %500 = vmatprep.subr.mxu0 0.0
    %501 = vmatpush1.msra.mxu0 0.0
    %502 = vmatprep.subr.mxu0 0.0
    %503 = vmatpush1.msra.mxu0 0.0
    %504 = vmatprep.subr.mxu0 0.0
    %505 = vmatpush1.msra.mxu0 0.0
    %506 = vmatprep.subr.mxu0 0.0
    %507 = vmatpush1.msra.mxu0 0.0
    %508 = vmatprep.subr.mxu0 0.0
    %509 = vmatpush1.msra.mxu0 0.0
    %510 = vmatprep.subr.mxu0 0.0
    %511 = vmatpush1.msra.mxu0 0.0
    %512 = vmatprep.subr.mxu0 0.0
    %513 = vmatpush1.msra.mxu0 0.0
    %514 = vmatprep.subr.mxu0 0.0
    %515 = vmatpush1.msra.mxu0 0.0
    %516 = vmatprep.subr.mxu0 0.0
    %517 = vmatpush1.msra.mxu0 0.0
    %518 = vmatprep.subr.mxu0 0.0
    %519 = vmatpush1.msra.mxu0 0.0
    %520 = vmatprep.subr.mxu0 0.0
    %521 = vmatpush1.msra.mxu0 0.0
    %522 = vmatprep.subr.mxu0 0.0
    %523 = vmatpush1.msra.mxu0 0.0
    %524 = vmatprep.subr.mxu0 0.0
    %525 = vmatpush1.msra.mxu0 0.0
    %526 = vmatprep.subr.mxu0 0.0
    %527 = vmatpush1.msra.mxu0 0.0
    %528 = vmatprep.subr.mxu0 0.0
    %529 = vmatpush1.msra.mxu0 0.0
    %530 = vmatprep.subr.mxu0 0.0
    %531 = vmatpush1.msra.mxu0 0.0
    %532 = vmatprep.mubr.f32.mxu0 0.0
    %533 = vmatmul.mubr.f32.gmra.mrb[0].mxu0 %v466
    %v534 = vpop.f32.mrb[0].mxu0
    %v535 = vadd.f32 %v457, %v534
    %v536 = vpop.f32.mrb[0].mxu0
    %v537 = vadd.f32 %v461, %v536
    %538 = vdwg.mxu0
    %v539 = vld [vmem:[#allocation8] sm:$0xff]
    %v540 = vld [vmem:[#allocation8 + $0x8] sm:$0xff]
    %v541 = vld [vmem:[#allocation8 + $0x10] sm:$0xff]
    %v542 = vld [vmem:[#allocation8 + $0x18] sm:$0xff]
    %v543 = vld [vmem:[#allocation8 + $0x20] sm:$0xff]
    %v544 = vld [vmem:[#allocation8 + $0x28] sm:$0xff]
    %v545 = vld [vmem:[#allocation8 + $0x30] sm:$0xff]
    %v546 = vld [vmem:[#allocation8 + $0x38] sm:$0xff]
    %v547 = vld [vmem:[#allocation8 + $0x40] sm:$0xff]
    %v548 = vld [vmem:[#allocation8 + $0x48] sm:$0xff]
    %v549 = vld [vmem:[#allocation8 + $0x50] sm:$0xff]
    %v550 = vld [vmem:[#allocation8 + $0x58] sm:$0xff]
    %v551 = vld [vmem:[#allocation8 + $0x60] sm:$0xff]
    %v552 = vld [vmem:[#allocation8 + $0x68] sm:$0xff]
    %v553 = vld [vmem:[#allocation8 + $0x70] sm:$0xff]
    %v554 = vld [vmem:[#allocation8 + $0x78] sm:$0xff]
    %v556 = vsel %vm464, 0.0, 0
    %558 = vmatprep.subr.mxu0 %v540
    %559 = vmatpush1.msra.mxu0 %v539
    %560 = vmatprep.subr.mxu0 %v542
    %561 = vmatpush1.msra.mxu0 %v541
    %562 = vmatprep.subr.mxu0 %v544
    %563 = vmatpush1.msra.mxu0 %v543
    %564 = vmatprep.subr.mxu0 %v546
    %565 = vmatpush1.msra.mxu0 %v545
    %566 = vmatprep.subr.mxu0 %v548
    %567 = vmatpush1.msra.mxu0 %v547
    %568 = vmatprep.subr.mxu0 %v550
    %569 = vmatpush1.msra.mxu0 %v549
    %570 = vmatprep.subr.mxu0 %v552
    %571 = vmatpush1.msra.mxu0 %v551
    %572 = vmatprep.subr.mxu0 %v554
    %573 = vmatpush1.msra.mxu0 %v553
    %574 = vmatprep.subr.mxu0 0.0
    %575 = vmatpush1.msra.mxu0 0.0
    %576 = vmatprep.subr.mxu0 0.0
    %577 = vmatpush1.msra.mxu0 0.0
    %578 = vmatprep.subr.mxu0 0.0
    %579 = vmatpush1.msra.mxu0 0.0
    %580 = vmatprep.subr.mxu0 0.0
    %581 = vmatpush1.msra.mxu0 0.0
    %582 = vmatprep.subr.mxu0 0.0
    %583 = vmatpush1.msra.mxu0 0.0
    %584 = vmatprep.subr.mxu0 0.0
    %585 = vmatpush1.msra.mxu0 0.0
    %586 = vmatprep.subr.mxu0 0.0
    %587 = vmatpush1.msra.mxu0 0.0
    %588 = vmatprep.subr.mxu0 0.0
    %589 = vmatpush1.msra.mxu0 0.0
    %590 = vmatprep.subr.mxu0 0.0
    %591 = vmatpush1.msra.mxu0 0.0
    %592 = vmatprep.subr.mxu0 0.0
    %593 = vmatpush1.msra.mxu0 0.0
    %594 = vmatprep.subr.mxu0 0.0
    %595 = vmatpush1.msra.mxu0 0.0
    %596 = vmatprep.subr.mxu0 0.0
    %597 = vmatpush1.msra.mxu0 0.0
    %598 = vmatprep.subr.mxu0 0.0
    %599 = vmatpush1.msra.mxu0 0.0
    %600 = vmatprep.subr.mxu0 0.0
    %601 = vmatpush1.msra.mxu0 0.0
    %602 = vmatprep.subr.mxu0 0.0
    %603 = vmatpush1.msra.mxu0 0.0
    %604 = vmatprep.subr.mxu0 0.0
    %605 = vmatpush1.msra.mxu0 0.0
    %606 = vmatprep.subr.mxu0 0.0
    %607 = vmatpush1.msra.mxu0 0.0
    %608 = vmatprep.subr.mxu0 0.0
    %609 = vmatpush1.msra.mxu0 0.0
    %610 = vmatprep.subr.mxu0 0.0
    %611 = vmatpush1.msra.mxu0 0.0
    %612 = vmatprep.subr.mxu0 0.0
    %613 = vmatpush1.msra.mxu0 0.0
    %614 = vmatprep.subr.mxu0 0.0
    %615 = vmatpush1.msra.mxu0 0.0
    %616 = vmatprep.subr.mxu0 0.0
    %617 = vmatpush1.msra.mxu0 0.0
    %618 = vmatprep.subr.mxu0 0.0
    %619 = vmatpush1.msra.mxu0 0.0
    %620 = vmatprep.subr.mxu0 0.0
    %621 = vmatpush1.msra.mxu0 0.0
    %622 = vmatprep.mubr.f32.mxu0 0.0
    %623 = vmatmul.mubr.f32.gmra.mrb[0].mxu0 %v556
    %v624 = vpop.f32.mrb[0].mxu0
    %v625 = vadd.f32 0.0, %v624
    %v626 = vpop.f32.mrb[0].mxu0
    %v627 = vadd.f32 0.0, %v626
    %628 = vdwg.mxu0
    %v629 = vadd.f32 %v535, %v625
    %v630 = vadd.f32 %v537, %v627
    %v631 = vxor.u32 %v629, 2147483648
    %v632 = vxor.u32 %v630, 2147483648
    %v633 = vmul.f32 %v631, 1.442695
    %v634 = vpow.pop %v633
    %v635 = vmul.f32 %v632, 1.442695
    %v636 = vpow.pop %v635
    %v637 = vadd.f32 %v634, 1.0
    %v638 = vadd.f32 %v636, 1.0
    %v639 = vrcp.pop %v637
    %v640 = vmul.f32 1.0, %v639
    %v641 = vrcp.pop %v638
    %v642 = vmul.f32 1.0, %v641
    %v643 = vtanh.pop %v630
    %v644 = vmul.f32 %v640, 0.0
    %646 = vrot.lane.b32.xlu0 %v643, 64
    %v647 = vpop.permute.xlu0 %646
    %v649 = vmul.f32 %v640, %v647
    %651 = vrot.lane.b32.xlu0 %v649, 64
    %v652 = vpop.permute.xlu0 %651
    %v654 = vadd.f32 %v644, %v652
    %v655 = vtanh.pop %v654
    %657 = vrot.lane.b32.xlu0 %v655, 64
    %v658 = vpop.permute.xlu0 %657
    %v660 = vmul.f32 %v642, %v658
    %v662 = vsel %vm464, %v660, 0
    %664 = vmatprep.subr.mxu0 %v540
    %665 = vmatpush1.msra.mxu0 %v539
    %666 = vmatprep.subr.mxu0 %v542
    %667 = vmatpush1.msra.mxu0 %v541
    %668 = vmatprep.subr.mxu0 %v544
    %669 = vmatpush1.msra.mxu0 %v543
    %670 = vmatprep.subr.mxu0 %v546
    %671 = vmatpush1.msra.mxu0 %v545
    %672 = vmatprep.subr.mxu0 %v548
    %673 = vmatpush1.msra.mxu0 %v547
    %674 = vmatprep.subr.mxu0 %v550
    %675 = vmatpush1.msra.mxu0 %v549
    %676 = vmatprep.subr.mxu0 %v552
    %677 = vmatpush1.msra.mxu0 %v551
    %678 = vmatprep.subr.mxu0 %v554
    %679 = vmatpush1.msra.mxu0 %v553
    %680 = vmatprep.subr.mxu0 0.0
    %681 = vmatpush1.msra.mxu0 0.0
    %682 = vmatprep.subr.mxu0 0.0
    %683 = vmatpush1.msra.mxu0 0.0
    %684 = vmatprep.subr.mxu0 0.0
    %685 = vmatpush1.msra.mxu0 0.0
    %686 = vmatprep.subr.mxu0 0.0
    %687 = vmatpush1.msra.mxu0 0.0
    %688 = vmatprep.subr.mxu0 0.0
    %689 = vmatpush1.msra.mxu0 0.0
    %690 = vmatprep.subr.mxu0 0.0
    %691 = vmatpush1.msra.mxu0 0.0
    %692 = vmatprep.subr.mxu0 0.0
    %693 = vmatpush1.msra.mxu0 0.0
    %694 = vmatprep.subr.mxu0 0.0
    %695 = vmatpush1.msra.mxu0 0.0
    %696 = vmatprep.subr.mxu0 0.0
    %697 = vmatpush1.msra.mxu0 0.0
    %698 = vmatprep.subr.mxu0 0.0
    %699 = vmatpush1.msra.mxu0 0.0
    %700 = vmatprep.subr.mxu0 0.0
    %701 = vmatpush1.msra.mxu0 0.0
    %702 = vmatprep.subr.mxu0 0.0
    %703 = vmatpush1.msra.mxu0 0.0
    %704 = vmatprep.subr.mxu0 0.0
    %705 = vmatpush1.msra.mxu0 0.0
    %706 = vmatprep.subr.mxu0 0.0
    %707 = vmatpush1.msra.mxu0 0.0
    %708 = vmatprep.subr.mxu0 0.0
    %709 = vmatpush1.msra.mxu0 0.0
    %710 = vmatprep.subr.mxu0 0.0
    %711 = vmatpush1.msra.mxu0 0.0
    %712 = vmatprep.subr.mxu0 0.0
    %713 = vmatpush1.msra.mxu0 0.0
    %714 = vmatprep.subr.mxu0 0.0
    %715 = vmatpush1.msra.mxu0 0.0
    %716 = vmatprep.subr.mxu0 0.0
    %717 = vmatpush1.msra.mxu0 0.0
    %718 = vmatprep.subr.mxu0 0.0
    %719 = vmatpush1.msra.mxu0 0.0
    %720 = vmatprep.subr.mxu0 0.0
    %721 = vmatpush1.msra.mxu0 0.0
    %722 = vmatprep.subr.mxu0 0.0
    %723 = vmatpush1.msra.mxu0 0.0
    %724 = vmatprep.subr.mxu0 0.0
    %725 = vmatpush1.msra.mxu0 0.0
    %726 = vmatprep.subr.mxu0 0.0
    %727 = vmatpush1.msra.mxu0 0.0
    %728 = vmatprep.mubr.f32.mxu0 0.0
    %729 = vmatmul.mubr.f32.gmra.mrb[0].mxu0 %v662
    %v730 = vpop.f32.mrb[0].mxu0
    %v731 = vadd.f32 0.0, %v730
    %v732 = vpop.f32.mrb[0].mxu0
    %v733 = vadd.f32 0.0, %v732
    %734 = vdwg.mxu0
    %v737 = vrot.slane %v731, 7
    %v738 = vrot.slane %v733, 7
    %v741 = vadd.f32 %v535, %v737
    %v742 = vadd.f32 %v537, %v738
    %v743 = vxor.u32 %v741, 2147483648
    %v744 = vxor.u32 %v742, 2147483648
    %v745 = vmul.f32 %v743, 1.442695
    %v746 = vpow.pop %v745
    %v747 = vmul.f32 %v744, 1.442695
    %v748 = vpow.pop %v747
    %v749 = vadd.f32 %v746, 1.0
    %v750 = vadd.f32 %v748, 1.0
    %v751 = vrcp.pop %v749
    %v752 = vmul.f32 1.0, %v751
    %v753 = vrcp.pop %v750
    %v754 = vmul.f32 1.0, %v753
    %v755 = vtanh.pop %v742
    %v757 = vrot.slane %v654, 7
    %v759 = vmul.f32 %v752, %v757
    %761 = vrot.lane.b32.xlu0 %v755, 64
    %v762 = vpop.permute.xlu0 %761
    %v764 = vmul.f32 %v752, %v762
    %766 = vrot.lane.b32.xlu0 %v764, 64
    %v767 = vpop.permute.xlu0 %766
    %v769 = vadd.f32 %v759, %v767
    %v770 = vtanh.pop %v769
    %772 = vrot.lane.b32.xlu0 %v770, 64
    %v773 = vpop.permute.xlu0 %772
    %v775 = vmul.f32 %v754, %v773
    %v777 = vrot.slane %v775, 1
    %v778 = vsel %vm464, %v777, 0
    %780 = vmatprep.subr.mxu0 %v540
    %781 = vmatpush1.msra.mxu0 %v539
    %782 = vmatprep.subr.mxu0 %v542
    %783 = vmatpush1.msra.mxu0 %v541
    %784 = vmatprep.subr.mxu0 %v544
    %785 = vmatpush1.msra.mxu0 %v543
    %786 = vmatprep.subr.mxu0 %v546
    %787 = vmatpush1.msra.mxu0 %v545
    %788 = vmatprep.subr.mxu0 %v548
    %789 = vmatpush1.msra.mxu0 %v547
    %790 = vmatprep.subr.mxu0 %v550
    %791 = vmatpush1.msra.mxu0 %v549
    %792 = vmatprep.subr.mxu0 %v552
    %793 = vmatpush1.msra.mxu0 %v551
    %794 = vmatprep.subr.mxu0 %v554
    %795 = vmatpush1.msra.mxu0 %v553
    %796 = vmatprep.subr.mxu0 0.0
    %797 = vmatpush1.msra.mxu0 0.0
    %798 = vmatprep.subr.mxu0 0.0
    %799 = vmatpush1.msra.mxu0 0.0
    %800 = vmatprep.subr.mxu0 0.0
    %801 = vmatpush1.msra.mxu0 0.0
    %802 = vmatprep.subr.mxu0 0.0
    %803 = vmatpush1.msra.mxu0 0.0
    %804 = vmatprep.subr.mxu0 0.0
    %805 = vmatpush1.msra.mxu0 0.0
    %806 = vmatprep.subr.mxu0 0.0
    %807 = vmatpush1.msra.mxu0 0.0
    %808 = vmatprep.subr.mxu0 0.0
    %809 = vmatpush1.msra.mxu0 0.0
    %810 = vmatprep.subr.mxu0 0.0
    %811 = vmatpush1.msra.mxu0 0.0
    %812 = vmatprep.subr.mxu0 0.0
    %813 = vmatpush1.msra.mxu0 0.0
    %814 = vmatprep.subr.mxu0 0.0
    %815 = vmatpush1.msra.mxu0 0.0
    %816 = vmatprep.subr.mxu0 0.0
    %817 = vmatpush1.msra.mxu0 0.0
    %818 = vmatprep.subr.mxu0 0.0
    %819 = vmatpush1.msra.mxu0 0.0
    %820 = vmatprep.subr.mxu0 0.0
    %821 = vmatpush1.msra.mxu0 0.0
    %822 = vmatprep.subr.mxu0 0.0
    %823 = vmatpush1.msra.mxu0 0.0
    %824 = vmatprep.subr.mxu0 0.0
    %825 = vmatpush1.msra.mxu0 0.0
    %826 = vmatprep.subr.mxu0 0.0
    %827 = vmatpush1.msra.mxu0 0.0
    %828 = vmatprep.subr.mxu0 0.0
    %829 = vmatpush1.msra.mxu0 0.0
    %830 = vmatprep.subr.mxu0 0.0
    %831 = vmatpush1.msra.mxu0 0.0
    %832 = vmatprep.subr.mxu0 0.0
    %833 = vmatpush1.msra.mxu0 0.0
    %834 = vmatprep.subr.mxu0 0.0
    %835 = vmatpush1.msra.mxu0 0.0
    %836 = vmatprep.subr.mxu0 0.0
    %837 = vmatpush1.msra.mxu0 0.0
    %838 = vmatprep.subr.mxu0 0.0
    %839 = vmatpush1.msra.mxu0 0.0
    %840 = vmatprep.subr.mxu0 0.0
    %841 = vmatpush1.msra.mxu0 0.0
    %842 = vmatprep.subr.mxu0 0.0
    %843 = vmatpush1.msra.mxu0 0.0
    %844 = vmatprep.mubr.f32.mxu0 0.0
    %845 = vmatmul.mubr.f32.gmra.mrb[0].mxu0 %v778
    %v846 = vpop.f32.mrb[0].mxu0
    %v847 = vadd.f32 0.0, %v846
    %v848 = vpop.f32.mrb[0].mxu0
    %v849 = vadd.f32 0.0, %v848
    %850 = vdwg.mxu0
    %v853 = vrot.slane %v847, 6
    %v854 = vrot.slane %v849, 6
    %v857 = vadd.f32 %v535, %v853
    %v858 = vadd.f32 %v537, %v854
    %v859 = vxor.u32 %v857, 2147483648
    %v860 = vxor.u32 %v858, 2147483648
    %v861 = vmul.f32 %v859, 1.442695
    %v862 = vpow.pop %v861
    %v863 = vmul.f32 %v860, 1.442695
    %v864 = vpow.pop %v863
    %v865 = vadd.f32 %v862, 1.0
    %v866 = vadd.f32 %v864, 1.0
    %v867 = vrcp.pop %v865
    %v868 = vmul.f32 1.0, %v867
    %v869 = vrcp.pop %v866
    %v870 = vmul.f32 1.0, %v869
    %v871 = vtanh.pop %v858
    %v873 = vrot.slane %v769, 7
    %v875 = vmul.f32 %v868, %v873
    %877 = vrot.lane.b32.xlu0 %v871, 64
    %v878 = vpop.permute.xlu0 %877
    %v880 = vmul.f32 %v868, %v878
    %882 = vrot.lane.b32.xlu0 %v880, 64
    %v883 = vpop.permute.xlu0 %882
    %v885 = vadd.f32 %v875, %v883
    %v886 = vtanh.pop %v885
    %888 = vrot.lane.b32.xlu0 %v886, 64
    %v889 = vpop.permute.xlu0 %888
    %v891 = vmul.f32 %v870, %v889
    %v893 = vrot.slane %v891, 2
    %v894 = vsel %vm464, %v893, 0
    %896 = vmatprep.subr.mxu0 %v540
    %897 = vmatpush1.msra.mxu0 %v539
    %898 = vmatprep.subr.mxu0 %v542
    %899 = vmatpush1.msra.mxu0 %v541
    %900 = vmatprep.subr.mxu0 %v544
    %901 = vmatpush1.msra.mxu0 %v543
    %902 = vmatprep.subr.mxu0 %v546
    %903 = vmatpush1.msra.mxu0 %v545
    %904 = vmatprep.subr.mxu0 %v548
    %905 = vmatpush1.msra.mxu0 %v547
    %906 = vmatprep.subr.mxu0 %v550
    %907 = vmatpush1.msra.mxu0 %v549
    %908 = vmatprep.subr.mxu0 %v552
    %909 = vmatpush1.msra.mxu0 %v551
    %910 = vmatprep.subr.mxu0 %v554
    %911 = vmatpush1.msra.mxu0 %v553
    %912 = vmatprep.subr.mxu0 0.0
    %913 = vmatpush1.msra.mxu0 0.0
    %914 = vmatprep.subr.mxu0 0.0
    %915 = vmatpush1.msra.mxu0 0.0
    %916 = vmatprep.subr.mxu0 0.0
    %917 = vmatpush1.msra.mxu0 0.0
    %918 = vmatprep.subr.mxu0 0.0
    %919 = vmatpush1.msra.mxu0 0.0
    %920 = vmatprep.subr.mxu0 0.0
    %921 = vmatpush1.msra.mxu0 0.0
    %922 = vmatprep.subr.mxu0 0.0
    %923 = vmatpush1.msra.mxu0 0.0
    %924 = vmatprep.subr.mxu0 0.0
    %925 = vmatpush1.msra.mxu0 0.0
    %926 = vmatprep.subr.mxu0 0.0
    %927 = vmatpush1.msra.mxu0 0.0
    %928 = vmatprep.subr.mxu0 0.0
    %929 = vmatpush1.msra.mxu0 0.0
    %930 = vmatprep.subr.mxu0 0.0
    %931 = vmatpush1.msra.mxu0 0.0
    %932 = vmatprep.subr.mxu0 0.0
    %933 = vmatpush1.msra.mxu0 0.0
    %934 = vmatprep.subr.mxu0 0.0
    %935 = vmatpush1.msra.mxu0 0.0
    %936 = vmatprep.subr.mxu0 0.0
    %937 = vmatpush1.msra.mxu0 0.0
    %938 = vmatprep.subr.mxu0 0.0
    %939 = vmatpush1.msra.mxu0 0.0
    %940 = vmatprep.subr.mxu0 0.0
    %941 = vmatpush1.msra.mxu0 0.0
    %942 = vmatprep.subr.mxu0 0.0
    %943 = vmatpush1.msra.mxu0 0.0
    %944 = vmatprep.subr.mxu0 0.0
    %945 = vmatpush1.msra.mxu0 0.0
    %946 = vmatprep.subr.mxu0 0.0
    %947 = vmatpush1.msra.mxu0 0.0
    %948 = vmatprep.subr.mxu0 0.0
    %949 = vmatpush1.msra.mxu0 0.0
    %950 = vmatprep.subr.mxu0 0.0
    %951 = vmatpush1.msra.mxu0 0.0
    %952 = vmatprep.subr.mxu0 0.0
    %953 = vmatpush1.msra.mxu0 0.0
    %954 = vmatprep.subr.mxu0 0.0
    %955 = vmatpush1.msra.mxu0 0.0
    %956 = vmatprep.subr.mxu0 0.0
    %957 = vmatpush1.msra.mxu0 0.0
    %958 = vmatprep.subr.mxu0 0.0
    %959 = vmatpush1.msra.mxu0 0.0
    %960 = vmatprep.mubr.f32.mxu0 0.0
    %961 = vmatmul.mubr.f32.gmra.mrb[0].mxu0 %v894
    %v962 = vpop.f32.mrb[0].mxu0
    %v963 = vadd.f32 0.0, %v962
    %v964 = vpop.f32.mrb[0].mxu0
    %v965 = vadd.f32 0.0, %v964
    %966 = vdwg.mxu0
    %v969 = vrot.slane %v963, 5
    %v970 = vrot.slane %v965, 5
    %v973 = vadd.f32 %v535, %v969
    %v974 = vadd.f32 %v537, %v970
    %v975 = vxor.u32 %v973, 2147483648
    %v976 = vxor.u32 %v974, 2147483648
    %v977 = vmul.f32 %v975, 1.442695
    %v978 = vpow.pop %v977
    %v979 = vmul.f32 %v976, 1.442695
    %v980 = vpow.pop %v979
    %v981 = vadd.f32 %v978, 1.0
    %v982 = vadd.f32 %v980, 1.0
    %v983 = vrcp.pop %v981
    %v984 = vmul.f32 1.0, %v983
    %v985 = vrcp.pop %v982
    %v986 = vmul.f32 1.0, %v985
    %v987 = vtanh.pop %v974
    %v989 = vrot.slane %v885, 7
    %v991 = vmul.f32 %v984, %v989
    %993 = vrot.lane.b32.xlu0 %v987, 64
    %v994 = vpop.permute.xlu0 %993
    %v996 = vmul.f32 %v984, %v994
    %998 = vrot.lane.b32.xlu0 %v996, 64
    %v999 = vpop.permute.xlu0 %998
    %v1001 = vadd.f32 %v991, %v999
    %v1002 = vtanh.pop %v1001
    %1004 = vrot.lane.b32.xlu0 %v1002, 64
    %v1005 = vpop.permute.xlu0 %1004
    %v1007 = vmul.f32 %v986, %v1005
    %v1009 = vrot.slane %v1007, 3
    %v1010 = vsel %vm464, %v1009, 0
    %1012 = vmatprep.subr.mxu0 %v540
    %1013 = vmatpush1.msra.mxu0 %v539
    %1014 = vmatprep.subr.mxu0 %v542
    %1015 = vmatpush1.msra.mxu0 %v541
    %1016 = vmatprep.subr.mxu0 %v544
    %1017 = vmatpush1.msra.mxu0 %v543
    %1018 = vmatprep.subr.mxu0 %v546
    %1019 = vmatpush1.msra.mxu0 %v545
    %1020 = vmatprep.subr.mxu0 %v548
    %1021 = vmatpush1.msra.mxu0 %v547
    %1022 = vmatprep.subr.mxu0 %v550
    %1023 = vmatpush1.msra.mxu0 %v549
    %1024 = vmatprep.subr.mxu0 %v552
    %1025 = vmatpush1.msra.mxu0 %v551
    %1026 = vmatprep.subr.mxu0 %v554
    %1027 = vmatpush1.msra.mxu0 %v553
    %1028 = vmatprep.subr.mxu0 0.0
    %1029 = vmatpush1.msra.mxu0 0.0
    %1030 = vmatprep.subr.mxu0 0.0
    %1031 = vmatpush1.msra.mxu0 0.0
    %1032 = vmatprep.subr.mxu0 0.0
    %1033 = vmatpush1.msra.mxu0 0.0
    %1034 = vmatprep.subr.mxu0 0.0
    %1035 = vmatpush1.msra.mxu0 0.0
    %1036 = vmatprep.subr.mxu0 0.0
    %1037 = vmatpush1.msra.mxu0 0.0
    %1038 = vmatprep.subr.mxu0 0.0
    %1039 = vmatpush1.msra.mxu0 0.0
    %1040 = vmatprep.subr.mxu0 0.0
    %1041 = vmatpush1.msra.mxu0 0.0
    %1042 = vmatprep.subr.mxu0 0.0
    %1043 = vmatpush1.msra.mxu0 0.0
    %1044 = vmatprep.subr.mxu0 0.0
    %1045 = vmatpush1.msra.mxu0 0.0
    %1046 = vmatprep.subr.mxu0 0.0
    %1047 = vmatpush1.msra.mxu0 0.0
    %1048 = vmatprep.subr.mxu0 0.0
    %1049 = vmatpush1.msra.mxu0 0.0
    %1050 = vmatprep.subr.mxu0 0.0
    %1051 = vmatpush1.msra.mxu0 0.0
    %1052 = vmatprep.subr.mxu0 0.0
    %1053 = vmatpush1.msra.mxu0 0.0
    %1054 = vmatprep.subr.mxu0 0.0
    %1055 = vmatpush1.msra.mxu0 0.0
    %1056 = vmatprep.subr.mxu0 0.0
    %1057 = vmatpush1.msra.mxu0 0.0
    %1058 = vmatprep.subr.mxu0 0.0
    %1059 = vmatpush1.msra.mxu0 0.0
    %1060 = vmatprep.subr.mxu0 0.0
    %1061 = vmatpush1.msra.mxu0 0.0
    %1062 = vmatprep.subr.mxu0 0.0
    %1063 = vmatpush1.msra.mxu0 0.0
    %1064 = vmatprep.subr.mxu0 0.0
    %1065 = vmatpush1.msra.mxu0 0.0
    %1066 = vmatprep.subr.mxu0 0.0
    %1067 = vmatpush1.msra.mxu0 0.0
    %1068 = vmatprep.subr.mxu0 0.0
    %1069 = vmatpush1.msra.mxu0 0.0
    %1070 = vmatprep.subr.mxu0 0.0
    %1071 = vmatpush1.msra.mxu0 0.0
    %1072 = vmatprep.subr.mxu0 0.0
    %1073 = vmatpush1.msra.mxu0 0.0
    %1074 = vmatprep.subr.mxu0 0.0
    %1075 = vmatpush1.msra.mxu0 0.0
    %1076 = vmatprep.mubr.f32.mxu0 0.0
    %1077 = vmatmul.mubr.f32.gmra.mrb[0].mxu0 %v1010
    %v1078 = vpop.f32.mrb[0].mxu0
    %v1079 = vadd.f32 0.0, %v1078
    %v1080 = vpop.f32.mrb[0].mxu0
    %v1081 = vadd.f32 0.0, %v1080
    %1082 = vdwg.mxu0
    %v1085 = vrot.slane %v1079, 4
    %v1086 = vrot.slane %v1081, 4
    %v1089 = vadd.f32 %v535, %v1085
    %v1090 = vadd.f32 %v537, %v1086
    %v1091 = vxor.u32 %v1089, 2147483648
    %v1092 = vxor.u32 %v1090, 2147483648
    %v1093 = vmul.f32 %v1091, 1.442695
    %v1094 = vpow.pop %v1093
    %v1095 = vmul.f32 %v1092, 1.442695
    %v1096 = vpow.pop %v1095
    %v1097 = vadd.f32 %v1094, 1.0
    %v1098 = vadd.f32 %v1096, 1.0
    %v1099 = vrcp.pop %v1097
    %v1100 = vmul.f32 1.0, %v1099
    %v1101 = vrcp.pop %v1098
    %v1102 = vmul.f32 1.0, %v1101
    %v1103 = vtanh.pop %v1090
    %v1105 = vrot.slane %v1001, 7
    %v1107 = vmul.f32 %v1100, %v1105
    %1109 = vrot.lane.b32.xlu0 %v1103, 64
    %v1110 = vpop.permute.xlu0 %1109
    %v1112 = vmul.f32 %v1100, %v1110
    %1114 = vrot.lane.b32.xlu0 %v1112, 64
    %v1115 = vpop.permute.xlu0 %1114
    %v1117 = vadd.f32 %v1107, %v1115
    %v1118 = vtanh.pop %v1117
    %1120 = vrot.lane.b32.xlu0 %v1118, 64
    %v1121 = vpop.permute.xlu0 %1120
    %v1123 = vmul.f32 %v1102, %v1121
    %v1125 = vrot.slane %v1123, 4
    %v1126 = vsel %vm464, %v1125, 0
    %1128 = vmatprep.subr.mxu0 %v540
    %1129 = vmatpush1.msra.mxu0 %v539
    %1130 = vmatprep.subr.mxu0 %v542
    %1131 = vmatpush1.msra.mxu0 %v541
    %1132 = vmatprep.subr.mxu0 %v544
    %1133 = vmatpush1.msra.mxu0 %v543
    %1134 = vmatprep.subr.mxu0 %v546
    %1135 = vmatpush1.msra.mxu0 %v545
    %1136 = vmatprep.subr.mxu0 %v548
    %1137 = vmatpush1.msra.mxu0 %v547
    %1138 = vmatprep.subr.mxu0 %v550
    %1139 = vmatpush1.msra.mxu0 %v549
    %1140 = vmatprep.subr.mxu0 %v552
    %1141 = vmatpush1.msra.mxu0 %v551
    %1142 = vmatprep.subr.mxu0 %v554
    %1143 = vmatpush1.msra.mxu0 %v553
    %1144 = vmatprep.subr.mxu0 0.0
    %1145 = vmatpush1.msra.mxu0 0.0
    %1146 = vmatprep.subr.mxu0 0.0
    %1147 = vmatpush1.msra.mxu0 0.0
    %1148 = vmatprep.subr.mxu0 0.0
    %1149 = vmatpush1.msra.mxu0 0.0
    %1150 = vmatprep.subr.mxu0 0.0
    %1151 = vmatpush1.msra.mxu0 0.0
    %1152 = vmatprep.subr.mxu0 0.0
    %1153 = vmatpush1.msra.mxu0 0.0
    %1154 = vmatprep.subr.mxu0 0.0
    %1155 = vmatpush1.msra.mxu0 0.0
    %1156 = vmatprep.subr.mxu0 0.0
    %1157 = vmatpush1.msra.mxu0 0.0
    %1158 = vmatprep.subr.mxu0 0.0
    %1159 = vmatpush1.msra.mxu0 0.0
    %1160 = vmatprep.subr.mxu0 0.0
    %1161 = vmatpush1.msra.mxu0 0.0
    %1162 = vmatprep.subr.mxu0 0.0
    %1163 = vmatpush1.msra.mxu0 0.0
    %1164 = vmatprep.subr.mxu0 0.0
    %1165 = vmatpush1.msra.mxu0 0.0
    %1166 = vmatprep.subr.mxu0 0.0
    %1167 = vmatpush1.msra.mxu0 0.0
    %1168 = vmatprep.subr.mxu0 0.0
    %1169 = vmatpush1.msra.mxu0 0.0
    %1170 = vmatprep.subr.mxu0 0.0
    %1171 = vmatpush1.msra.mxu0 0.0
    %1172 = vmatprep.subr.mxu0 0.0
    %1173 = vmatpush1.msra.mxu0 0.0
    %1174 = vmatprep.subr.mxu0 0.0
    %1175 = vmatpush1.msra.mxu0 0.0
    %1176 = vmatprep.subr.mxu0 0.0
    %1177 = vmatpush1.msra.mxu0 0.0
    %1178 = vmatprep.subr.mxu0 0.0
    %1179 = vmatpush1.msra.mxu0 0.0
    %1180 = vmatprep.subr.mxu0 0.0
    %1181 = vmatpush1.msra.mxu0 0.0
    %1182 = vmatprep.subr.mxu0 0.0
    %1183 = vmatpush1.msra.mxu0 0.0
    %1184 = vmatprep.subr.mxu0 0.0
    %1185 = vmatpush1.msra.mxu0 0.0
    %1186 = vmatprep.subr.mxu0 0.0
    %1187 = vmatpush1.msra.mxu0 0.0
    %1188 = vmatprep.subr.mxu0 0.0
    %1189 = vmatpush1.msra.mxu0 0.0
    %1190 = vmatprep.subr.mxu0 0.0
    %1191 = vmatpush1.msra.mxu0 0.0
    %1192 = vmatprep.mubr.f32.mxu0 0.0
    %1193 = vmatmul.mubr.f32.gmra.mrb[0].mxu0 %v1126
    %v1194 = vpop.f32.mrb[0].mxu0
    %v1195 = vadd.f32 0.0, %v1194
    %v1196 = vpop.f32.mrb[0].mxu0
    %v1197 = vadd.f32 0.0, %v1196
    %1198 = vdwg.mxu0
    %v1201 = vrot.slane %v1195, 3
    %v1202 = vrot.slane %v1197, 3
    %v1205 = vadd.f32 %v535, %v1201
    %v1206 = vadd.f32 %v537, %v1202
    %v1207 = vxor.u32 %v1205, 2147483648
    %v1208 = vxor.u32 %v1206, 2147483648
    %v1209 = vmul.f32 %v1207, 1.442695
    %v1210 = vpow.pop %v1209
    %v1211 = vmul.f32 %v1208, 1.442695
    %v1212 = vpow.pop %v1211
    %v1213 = vadd.f32 %v1210, 1.0
    %v1214 = vadd.f32 %v1212, 1.0
    %v1215 = vrcp.pop %v1213
    %v1216 = vmul.f32 1.0, %v1215
    %v1217 = vrcp.pop %v1214
    %v1218 = vmul.f32 1.0, %v1217
    %v1219 = vtanh.pop %v1206
    %v1221 = vrot.slane %v1117, 7
    %v1223 = vmul.f32 %v1216, %v1221
    %1225 = vrot.lane.b32.xlu0 %v1219, 64
    %v1226 = vpop.permute.xlu0 %1225
    %v1228 = vmul.f32 %v1216, %v1226
    %1230 = vrot.lane.b32.xlu0 %v1228, 64
    %v1231 = vpop.permute.xlu0 %1230
    %v1233 = vadd.f32 %v1223, %v1231
    %v1234 = vtanh.pop %v1233
    %1236 = vrot.lane.b32.xlu0 %v1234, 64
    %v1237 = vpop.permute.xlu0 %1236
    %v1239 = vmul.f32 %v1218, %v1237
    %v1241 = vrot.slane %v1239, 5
    %v1242 = vsel %vm464, %v1241, 0
    %1244 = vmatprep.subr.mxu0 %v540
    %1245 = vmatpush1.msra.mxu0 %v539
    %1246 = vmatprep.subr.mxu0 %v542
    %1247 = vmatpush1.msra.mxu0 %v541
    %1248 = vmatprep.subr.mxu0 %v544
    %1249 = vmatpush1.msra.mxu0 %v543
    %1250 = vmatprep.subr.mxu0 %v546
    %1251 = vmatpush1.msra.mxu0 %v545
    %1252 = vmatprep.subr.mxu0 %v548
    %1253 = vmatpush1.msra.mxu0 %v547
    %1254 = vmatprep.subr.mxu0 %v550
    %1255 = vmatpush1.msra.mxu0 %v549
    %1256 = vmatprep.subr.mxu0 %v552
    %1257 = vmatpush1.msra.mxu0 %v551
    %1258 = vmatprep.subr.mxu0 %v554
    %1259 = vmatpush1.msra.mxu0 %v553
    %1260 = vmatprep.subr.mxu0 0.0
    %1261 = vmatpush1.msra.mxu0 0.0
    %1262 = vmatprep.subr.mxu0 0.0
    %1263 = vmatpush1.msra.mxu0 0.0
    %1264 = vmatprep.subr.mxu0 0.0
    %1265 = vmatpush1.msra.mxu0 0.0
    %1266 = vmatprep.subr.mxu0 0.0
    %1267 = vmatpush1.msra.mxu0 0.0
    %1268 = vmatprep.subr.mxu0 0.0
    %1269 = vmatpush1.msra.mxu0 0.0
    %1270 = vmatprep.subr.mxu0 0.0
    %1271 = vmatpush1.msra.mxu0 0.0
    %1272 = vmatprep.subr.mxu0 0.0
    %1273 = vmatpush1.msra.mxu0 0.0
    %1274 = vmatprep.subr.mxu0 0.0
    %1275 = vmatpush1.msra.mxu0 0.0
    %1276 = vmatprep.subr.mxu0 0.0
    %1277 = vmatpush1.msra.mxu0 0.0
    %1278 = vmatprep.subr.mxu0 0.0
    %1279 = vmatpush1.msra.mxu0 0.0
    %1280 = vmatprep.subr.mxu0 0.0
    %1281 = vmatpush1.msra.mxu0 0.0
    %1282 = vmatprep.subr.mxu0 0.0
    %1283 = vmatpush1.msra.mxu0 0.0
    %1284 = vmatprep.subr.mxu0 0.0
    %1285 = vmatpush1.msra.mxu0 0.0
    %1286 = vmatprep.subr.mxu0 0.0
    %1287 = vmatpush1.msra.mxu0 0.0
    %1288 = vmatprep.subr.mxu0 0.0
    %1289 = vmatpush1.msra.mxu0 0.0
    %1290 = vmatprep.subr.mxu0 0.0
    %1291 = vmatpush1.msra.mxu0 0.0
    %1292 = vmatprep.subr.mxu0 0.0
    %1293 = vmatpush1.msra.mxu0 0.0
    %1294 = vmatprep.subr.mxu0 0.0
    %1295 = vmatpush1.msra.mxu0 0.0
    %1296 = vmatprep.subr.mxu0 0.0
    %1297 = vmatpush1.msra.mxu0 0.0
    %1298 = vmatprep.subr.mxu0 0.0
    %1299 = vmatpush1.msra.mxu0 0.0
    %1300 = vmatprep.subr.mxu0 0.0
    %1301 = vmatpush1.msra.mxu0 0.0
    %1302 = vmatprep.subr.mxu0 0.0
    %1303 = vmatpush1.msra.mxu0 0.0
    %1304 = vmatprep.subr.mxu0 0.0
    %1305 = vmatpush1.msra.mxu0 0.0
    %1306 = vmatprep.subr.mxu0 0.0
    %1307 = vmatpush1.msra.mxu0 0.0
    %1308 = vmatprep.mubr.f32.mxu0 0.0
    %1309 = vmatmul.mubr.f32.gmra.mrb[0].mxu0 %v1242
    %v1310 = vpop.f32.mrb[0].mxu0
    %v1311 = vadd.f32 0.0, %v1310
    %v1312 = vpop.f32.mrb[0].mxu0
    %v1313 = vadd.f32 0.0, %v1312
    %1314 = vdwg.mxu0
    %v1317 = vrot.slane %v1311, 2
    %v1318 = vrot.slane %v1313, 2
    %v1321 = vadd.f32 %v535, %v1317
    %v1322 = vadd.f32 %v537, %v1318
    %v1323 = vxor.u32 %v1321, 2147483648
    %v1324 = vxor.u32 %v1322, 2147483648
    %v1325 = vmul.f32 %v1323, 1.442695
    %v1326 = vpow.pop %v1325
    %v1327 = vmul.f32 %v1324, 1.442695
    %v1328 = vpow.pop %v1327
    %v1329 = vadd.f32 %v1326, 1.0
    %v1330 = vadd.f32 %v1328, 1.0
    %v1331 = vrcp.pop %v1329
    %v1332 = vmul.f32 1.0, %v1331
    %v1333 = vrcp.pop %v1330
    %v1334 = vmul.f32 1.0, %v1333
    %v1335 = vtanh.pop %v1322
    %v1337 = vrot.slane %v1233, 7
    %v1339 = vmul.f32 %v1332, %v1337
    %1341 = vrot.lane.b32.xlu0 %v1335, 64
    %v1342 = vpop.permute.xlu0 %1341
    %v1344 = vmul.f32 %v1332, %v1342
    %1346 = vrot.lane.b32.xlu0 %v1344, 64
    %v1347 = vpop.permute.xlu0 %1346
    %v1349 = vadd.f32 %v1339, %v1347
    %v1350 = vtanh.pop %v1349
    %1352 = vrot.lane.b32.xlu0 %v1350, 64
    %v1353 = vpop.permute.xlu0 %1352
    %v1355 = vmul.f32 %v1334, %v1353
    %v1357 = vrot.slane %v1355, 6
    %v1358 = vsel %vm464, %v1357, 0
    %1360 = vmatprep.subr.mxu0 %v540
    %1361 = vmatpush1.msra.mxu0 %v539
    %1362 = vmatprep.subr.mxu0 %v542
    %1363 = vmatpush1.msra.mxu0 %v541
    %1364 = vmatprep.subr.mxu0 %v544
    %1365 = vmatpush1.msra.mxu0 %v543
    %1366 = vmatprep.subr.mxu0 %v546
    %1367 = vmatpush1.msra.mxu0 %v545
    %1368 = vmatprep.subr.mxu0 %v548
    %1369 = vmatpush1.msra.mxu0 %v547
    %1370 = vmatprep.subr.mxu0 %v550
    %1371 = vmatpush1.msra.mxu0 %v549
    %1372 = vmatprep.subr.mxu0 %v552
    %1373 = vmatpush1.msra.mxu0 %v551
    %1374 = vmatprep.subr.mxu0 %v554
    %1375 = vmatpush1.msra.mxu0 %v553
    %1376 = vmatprep.subr.mxu0 0.0
    %1377 = vmatpush1.msra.mxu0 0.0
    %1378 = vmatprep.subr.mxu0 0.0
    %1379 = vmatpush1.msra.mxu0 0.0
    %1380 = vmatprep.subr.mxu0 0.0
    %1381 = vmatpush1.msra.mxu0 0.0
    %1382 = vmatprep.subr.mxu0 0.0
    %1383 = vmatpush1.msra.mxu0 0.0
    %1384 = vmatprep.subr.mxu0 0.0
    %1385 = vmatpush1.msra.mxu0 0.0
    %1386 = vmatprep.subr.mxu0 0.0
    %1387 = vmatpush1.msra.mxu0 0.0
    %1388 = vmatprep.subr.mxu0 0.0
    %1389 = vmatpush1.msra.mxu0 0.0
    %1390 = vmatprep.subr.mxu0 0.0
    %1391 = vmatpush1.msra.mxu0 0.0
    %1392 = vmatprep.subr.mxu0 0.0
    %1393 = vmatpush1.msra.mxu0 0.0
    %1394 = vmatprep.subr.mxu0 0.0
    %1395 = vmatpush1.msra.mxu0 0.0
    %1396 = vmatprep.subr.mxu0 0.0
    %1397 = vmatpush1.msra.mxu0 0.0
    %1398 = vmatprep.subr.mxu0 0.0
    %1399 = vmatpush1.msra.mxu0 0.0
    %1400 = vmatprep.subr.mxu0 0.0
    %1401 = vmatpush1.msra.mxu0 0.0
    %1402 = vmatprep.subr.mxu0 0.0
    %1403 = vmatpush1.msra.mxu0 0.0
    %1404 = vmatprep.subr.mxu0 0.0
    %1405 = vmatpush1.msra.mxu0 0.0
    %1406 = vmatprep.subr.mxu0 0.0
    %1407 = vmatpush1.msra.mxu0 0.0
    %1408 = vmatprep.subr.mxu0 0.0
    %1409 = vmatpush1.msra.mxu0 0.0
    %1410 = vmatprep.subr.mxu0 0.0
    %1411 = vmatpush1.msra.mxu0 0.0
    %1412 = vmatprep.subr.mxu0 0.0
    %1413 = vmatpush1.msra.mxu0 0.0
    %1414 = vmatprep.subr.mxu0 0.0
    %1415 = vmatpush1.msra.mxu0 0.0
    %1416 = vmatprep.subr.mxu0 0.0
    %1417 = vmatpush1.msra.mxu0 0.0
    %1418 = vmatprep.subr.mxu0 0.0
    %1419 = vmatpush1.msra.mxu0 0.0
    %1420 = vmatprep.subr.mxu0 0.0
    %1421 = vmatpush1.msra.mxu0 0.0
    %1422 = vmatprep.subr.mxu0 0.0
    %1423 = vmatpush1.msra.mxu0 0.0
    %1424 = vmatprep.mubr.f32.mxu0 0.0
    %1425 = vmatmul.mubr.f32.gmra.mrb[0].mxu0 %v1358
    %v1426 = vpop.f32.mrb[0].mxu0
    %v1427 = vadd.f32 0.0, %v1426
    %v1428 = vpop.f32.mrb[0].mxu0
    %v1429 = vadd.f32 0.0, %v1428
    %1430 = vdwg.mxu0
    %v1433 = vrot.slane %v1427, 1
    %v1434 = vrot.slane %v1429, 1
    %v1437 = vadd.f32 %v535, %v1433
    %v1438 = vadd.f32 %v537, %v1434
    %v1439 = vxor.u32 %v1437, 2147483648
    %v1440 = vxor.u32 %v1438, 2147483648
    %v1441 = vmul.f32 %v1439, 1.442695
    %v1442 = vpow.pop %v1441
    %v1443 = vmul.f32 %v1440, 1.442695
    %v1444 = vpow.pop %v1443
    %v1445 = vadd.f32 %v1442, 1.0
    %v1446 = vadd.f32 %v1444, 1.0
    %v1447 = vrcp.pop %v1445
    %v1448 = vmul.f32 1.0, %v1447
    %v1449 = vrcp.pop %v1446
    %v1450 = vmul.f32 1.0, %v1449
    %v1451 = vtanh.pop %v1438
    %v1453 = vrot.slane %v1349, 7
    %v1455 = vmul.f32 %v1448, %v1453
    %1457 = vrot.lane.b32.xlu0 %v1451, 64
    %v1458 = vpop.permute.xlu0 %1457
    %v1460 = vmul.f32 %v1448, %v1458
    %1462 = vrot.lane.b32.xlu0 %v1460, 64
    %v1463 = vpop.permute.xlu0 %1462
    %v1465 = vadd.f32 %v1455, %v1463
    %v1466 = vtanh.pop %v1465
    %1468 = vrot.lane.b32.xlu0 %v1466, 64
    %v1469 = vpop.permute.xlu0 %1468
    %v1471 = vmul.f32 %v1450, %v1469
    %v1472 = vsel %vm145, %v660, %v775
    %v1473 = vsel %vm147, %v1472, %v891
    %v1474 = vsel %vm149, %v1473, %v1007
    %v1475 = vsel %vm151, %v1474, %v1123
    %v1476 = vsel %vm153, %v1475, %v1239
    %v1477 = vsel %vm155, %v1476, %v1355
    %v1478 = vsel %vm157, %v1477, %v1471
    %v1480 = vrot.slane %v1471, 7
    %v1482 = vrot.slane %v1355, 5
    %v1484 = vrot.slane %v1239, 3
    %v1486 = vrot.slane %v1123, 1
    %v1488 = vrot.slane %v1007, 7
    %v1490 = vrot.slane %v891, 5
    %v1492 = vrot.slane %v775, 3
    %v1494 = vrot.slane %v660, 1
    %v1496 = vsel %vm145, %v1480, %v1482
    %v1497 = vsel %vm147, %v1496, %v1484
    %v1498 = vsel %vm149, %v1497, %v1486
    %v1499 = vsel %vm151, %v1498, %v1488
    %v1500 = vsel %vm153, %v1499, %v1490
    %v1501 = vsel %vm155, %v1500, %v1492
    %v1502 = vsel %vm157, %v1501, %v1494
    %v1503 = vsel %vm342, %v1478, %v1502
    %1504 = vst.msk [vmem:[#allocation10] sm:$0xff] %vm464, %v1503
    %v1506 = vrot.slane %v1465, 6
    %1507 = vrot.lane.b32.xlu0 %v1506, 64
    %v1508 = vpop.permute.xlu0 %1507
    %v1510 = vsel %vm145, %v1480, %v1508
    %vm1511 = vcmask 517120
    %1512 = vst.msk [vmem:[#allocation12] sm:$0x3] %vm1511, %v1510
    // Predicated region
    $region54: #{tpu_custom_call.1} parent=1 // pred_check
      _
    $region55: #{tpu_custom_call.1} parent=1 // pred_check_branch
      %1514 = sbr.rel (0) target = $region57
    $region56: #{tpu_custom_call.1} parent=1 // pred_region
      %s1516 = ssub.s32 16, 16
      %1517 = vsyncadd [#allocation4], %s1516
      %s1519 = sshll.u32 [#allocation9], 4
      %s1520 = int_to_ptr.vmem [resolvable:$true] %s1519
      %1522 = dma.vmem_to_hbm [thread:$0]  %s1520, 16, %s10, [#allocation4]
    $region57: #{tpu_custom_call.1} parent=1 // pred_fallthru
      _
    // Predicated region
    $region58: #{tpu_custom_call.1} parent=1 // pred_check
      _
    $region59: #{tpu_custom_call.1} parent=1 // pred_check_branch
      %1524 = sbr.rel (0) target = $region61
    $region60: #{tpu_custom_call.1} parent=1 // pred_region
      %s1526 = ssub.s32 128, 128
      %1527 = vsyncadd [#allocation11], %s1526
      %s1529 = sshll.u32 [#allocation10], 4
      %s1530 = int_to_ptr.vmem [resolvable:$true] %s1529
      %1532 = dma.vmem_to_hbm [thread:$0]  %s1530, 128, %s11, [#allocation11]
    $region61: #{tpu_custom_call.1} parent=1 // pred_fallthru
      _
    // Predicated region
    $region62: #{tpu_custom_call.1} parent=1 // pred_check
      _
    $region63: #{tpu_custom_call.1} parent=1 // pred_check_branch
      %1534 = sbr.rel (0) target = $region65
    $region64: #{tpu_custom_call.1} parent=1 // pred_region
      %s1536 = ssub.s32 32, 32
      %1537 = vsyncadd [#allocation11], %s1536
      %s1539 = sshll.u32 [#allocation12], 4
      %s1540 = int_to_ptr.vmem [resolvable:$true] %s1539
      %1542 = dma.vmem_to_hbm [thread:$0]  %s1540, 32, %s12, [#allocation11]
    $region65: #{tpu_custom_call.1} parent=1 // pred_fallthru
      _
    // Predicated region
    $region66: #{tpu_custom_call.1} parent=1 // pred_check
      _
    $region67: #{tpu_custom_call.1} parent=1 // pred_check_branch
      %1544 = sbr.rel (0) target = $region69
    $region68: #{tpu_custom_call.1} parent=1 // pred_region
      %1545 = dma.done [#allocation4], 16
    $region69: #{tpu_custom_call.1} parent=1 // pred_fallthru
      _
    // Predicated region
    $region70: #{tpu_custom_call.1} parent=1 // pred_check
      _
    $region71: #{tpu_custom_call.1} parent=1 // pred_check_branch
      %1547 = sbr.rel (0) target = $region73
    $region72: #{tpu_custom_call.1} parent=1 // pred_region
      %1548 = dma.done [#allocation11], 128
    $region73: #{tpu_custom_call.1} parent=1 // pred_fallthru
      _
    // Predicated region
    $region74: #{tpu_custom_call.1} parent=1 // pred_check
      _
    $region75: #{tpu_custom_call.1} parent=1 // pred_check_branch
      %1550 = sbr.rel (0) target = $region77
    $region76: #{tpu_custom_call.1} parent=1 // pred_region
      %1551 = dma.done [#allocation11], 32
    $region77: #{tpu_custom_call.1} parent=1 // pred_fallthru
      _
    %1552 = vsyncpa [#allocation3], 1
    %1553 = vsyncpa [#allocation4], 1
    %1554 = vsyncpa [#allocation11], 1
    %1555 = vsyncpa [#allocation5], 1
    %1556 = vsyncpa [#allocation7], 1

</llo_original>
